<compile_context>
chip_gen: v5e
topology: v5e:2x2
jax: 0.10.0
libtpu: 0.0.40
codegen_flags: <defaults>
</compile_context>

<pallas_src>
import functools
import math

import jax
import jax.numpy as jnp
from jax.experimental import pallas as pl
from jax.experimental.pallas import tpu as pltpu

# Module hyper-parameters (PyTorch defaults)
PI = 0.5
SIGMA1 = math.exp(0.0)
SIGMA2 = math.exp(-6.0)
LOG_SIGMA1 = 0.0
LOG_SIGMA2 = -6.0
LOG_2PI = math.log(2.0 * math.pi)


def _round_up(x, m):
    return (x + m - 1) // m * m


def _pick_block(total, cap):
    """Largest multiple-of-128 divisor of `total` (itself a multiple of 128) <= cap."""
    blk = min(total, cap)
    while total % blk != 0:
        blk -= 128
    return blk


# --------------------------------------------------------------------------
# Kernel 1: reparameterized weight sample + KL(q||p), tiled over K rows.
# Inputs arrive already transposed/padded to the lane-aligned (K_pad, OC_pad)
# layout; the padding mask is generated in-kernel (iota vs. static k/oc), the
# bf16 MXU operand is emitted directly, and the KL sum is accumulated in SMEM.
# --------------------------------------------------------------------------
def _sample_kl_kernel(mu_ref, lv_ref, eps_ref, w_ref, kl_ref, acc_ref, *, k, oc, blk):
    i = pl.program_id(0)
    mu = mu_ref[...]
    lv = lv_ref[...]
    eps = eps_ref[...]

    sigma = jnp.exp(0.5 * lv)
    w = mu + sigma * eps                       # f32 sample; padding stays exactly 0
    w_ref[...] = w.astype(w_ref.dtype)         # bf16 (blk, OC_pad) slice of MXU operand

    # In-kernel padding mask (no extra HBM input): valid rows < k, valid cols < oc.
    rows = jax.lax.broadcasted_iota(jnp.int32, mu.shape, 0) + i * blk
    cols = jax.lax.broadcasted_iota(jnp.int32, mu.shape, 1)
    mask = jnp.where((rows < k) & (cols < oc), 1.0, 0.0).astype(jnp.float32)

    # log q(w | mu, logvar): since (w - mu)^2 / exp(lv) == eps^2, skip exp & divide.
    log_q = -0.5 * LOG_2PI - 0.5 * lv - 0.5 * eps * eps

    # log p(w): scale mixture of two zero-mean Gaussians via logaddexp (no underflow).
    w2 = w * w
    log_n1 = -0.5 * LOG_2PI - LOG_SIGMA1 - w2 * (0.5 / (SIGMA1 * SIGMA1))
    log_n2 = -0.5 * LOG_2PI - LOG_SIGMA2 - w2 * (0.5 / (SIGMA2 * SIGMA2))
    log_p = jnp.logaddexp(math.log(PI) + log_n1, math.log(1.0 - PI) + log_n2)

    tile_kl = jnp.sum(mask * (log_q - log_p))

    @pl.when(i == 0)
    def _():
        acc_ref[0] = 0.0

    acc_ref[0] += tile_kl

    @pl.when(i == pl.num_programs(0) - 1)
    def _():
        kl_ref[0, 0] = acc_ref[0]


def sample_weight_and_kl(conv_mean, conv_logvar, eps, k_pad, oc_pad):
    oc = conv_mean.shape[0]
    k = conv_mean.shape[1] * conv_mean.shape[2] * conv_mean.shape[3]

    def pad_t(a):  # (OC, IC, KH, KW) -> zero-padded (K_pad, OC_pad) f32
        a2 = a.reshape(oc, k).astype(jnp.float32).T
        return jnp.pad(a2, ((0, k_pad - k), (0, oc_pad - oc)))

    mu_t = pad_t(conv_mean)
    lv_t = pad_t(conv_logvar)
    eps_t = pad_t(eps)

    blk = _pick_block(k_pad, 512)
    grid = (k_pad // blk,)
    kernel = functools.partial(_sample_kl_kernel, k=k, oc=oc, blk=blk)

    w_t, kl = pl.pallas_call(
        kernel,
        out_shape=(
            jax.ShapeDtypeStruct((k_pad, oc_pad), jnp.bfloat16),
            jax.ShapeDtypeStruct((1, 1), jnp.float32),
        ),
        grid_spec=pltpu.PrefetchScalarGridSpec(
            num_scalar_prefetch=0,
            grid=grid,
            in_specs=[pl.BlockSpec((blk, oc_pad), lambda i: (i, 0))] * 3,
            out_specs=(
                pl.BlockSpec((blk, oc_pad), lambda i: (i, 0)),
                pl.BlockSpec(memory_space=pltpu.MemorySpace.SMEM),
            ),
            scratch_shapes=[pltpu.SMEM((1,), jnp.float32)],
        ),
        compiler_params=pltpu.CompilerParams(
            dimension_semantics=("arbitrary",),
            vmem_limit_bytes=32 * 1024 * 1024,
        ),
    )(mu_t, lv_t, eps_t)
    return w_t, kl[0, 0]


# --------------------------------------------------------------------------
# Kernel 2a: weight-resident im2col matmul (the conv hot path, runs on the MXU).
# Single M grid axis; bf16 operands, f32 MXU accumulate, bf16 output store.
# --------------------------------------------------------------------------
def _matmul_resident_kernel(a_ref, b_ref, o_ref):
    o_ref[...] = jnp.dot(a_ref[...], b_ref[...],
                         preferred_element_type=jnp.float32).astype(o_ref.dtype)


def _conv_matmul_resident(patches, w_t, *, tm):
    m_pad, k_pad = patches.shape
    oc_pad = w_t.shape[1]
    grid = (m_pad // tm,)
    return pl.pallas_call(
        _matmul_resident_kernel,
        out_shape=jax.ShapeDtypeStruct((m_pad, oc_pad), jnp.bfloat16),
        grid_spec=pltpu.PrefetchScalarGridSpec(
            num_scalar_prefetch=0,
            grid=grid,
            in_specs=[
                pl.BlockSpec((tm, k_pad), lambda i: (i, 0)),
                pl.BlockSpec((k_pad, oc_pad), lambda i: (0, 0)),  # VMEM-resident weight
            ],
            out_specs=pl.BlockSpec((tm, oc_pad), lambda i: (i, 0)),
        ),
        compiler_params=pltpu.CompilerParams(
            dimension_semantics=("parallel",),
            vmem_limit_bytes=48 * 1024 * 1024,  # budgeted below 64 MiB/TC (v7x)
        ),
        cost_estimate=pl.CostEstimate(
            flops=2 * m_pad * k_pad * oc_pad,
            transcendentals=0,
            bytes_accessed=m_pad * k_pad * 2 + k_pad * oc_pad * 2 + m_pad * oc_pad * 2,
        ),
    )(patches, w_t)


# --------------------------------------------------------------------------
# Kernel 2b: K-tiled fallback (only for filters too large to hold VMEM-resident).
# Output store is guarded by the last-K predicate (no per-step cast/store churn).
# --------------------------------------------------------------------------
def _matmul_ktiled_kernel(a_ref, b_ref, o_ref, acc_ref):
    @pl.when(pl.program_id(2) == 0)
    def _():
        acc_ref[...] = jnp.zeros_like(acc_ref)

    acc_ref[...] += jnp.dot(a_ref[...], b_ref[...],
                            preferred_element_type=jnp.float32)

    @pl.when(pl.program_id(2) == pl.num_programs(2) - 1)
    def _():
        o_ref[...] = acc_ref[...].astype(o_ref.dtype)


def _conv_matmul_ktiled(patches, w_t, *, tm, tn, tk):
    m_pad, k_pad = patches.shape
    oc_pad = w_t.shape[1]
    grid = (m_pad // tm, oc_pad // tn, k_pad // tk)
    return pl.pallas_call(
        _matmul_ktiled_kernel,
        out_shape=jax.ShapeDtypeStruct((m_pad, oc_pad), jnp.bfloat16),
        grid_spec=pltpu.PrefetchScalarGridSpec(
            num_scalar_prefetch=0,
            grid=grid,
            in_specs=[
                pl.BlockSpec((tm, tk), lambda i, j, kk: (i, kk)),
                pl.BlockSpec((tk, tn), lambda i, j, kk: (kk, j)),
            ],
            out_specs=pl.BlockSpec((tm, tn), lambda i, j, kk: (i, j)),
            scratch_shapes=[pltpu.VMEM((tm, tn), jnp.float32)],
        ),
        compiler_params=pltpu.CompilerParams(
            dimension_semantics=("parallel", "parallel", "arbitrary"),
            vmem_limit_bytes=48 * 1024 * 1024,
        ),
        cost_estimate=pl.CostEstimate(
            flops=2 * m_pad * k_pad * oc_pad,
            transcendentals=0,
            bytes_accessed=m_pad * k_pad * 2 + k_pad * oc_pad * 2 + m_pad * oc_pad * 2,
        ),
    )(patches, w_t)


# --------------------------------------------------------------------------
# Glue: im2col patch extraction in bf16 (pure layout work, kept in plain JAX).
# TODO(synk): implicit GEMM (streaming shifted activation windows per filter tap
# from HBM inside the kernel) would eliminate the KH*KW-fold activation inflation
# entirely; not needed at these shapes.
# --------------------------------------------------------------------------
def _im2col(x, kh, kw, stride, padding, dilation):
    n, c, h, w = x.shape
    sh, sw = stride
    ph, pw = padding
    dh, dw = dilation
    xp = jnp.pad(x, ((0, 0), (0, 0), (ph, ph), (pw, pw)))
    hp, wp = h + 2 * ph, w + 2 * pw
    oh = (hp - (dh * (kh - 1) + 1)) // sh + 1
    ow = (wp - (dw * (kw - 1) + 1)) // sw + 1
    cols = []
    for i in range(kh):
        for j in range(kw):
            sl = xp[:, :,
                    i * dh: i * dh + (oh - 1) * sh + 1: sh,
                    j * dw: j * dw + (ow - 1) * sw + 1: sw]  # (n, c, oh, ow)
            cols.append(sl)
    patches = jnp.stack(cols, axis=2)                  # (n, c, kh*kw, oh, ow)
    patches = patches.reshape(n, c * kh * kw, oh, ow)  # K ordering = (c, kh, kw)
    patches = patches.transpose(0, 2, 3, 1).reshape(n * oh * ow, c * kh * kw)
    return patches, oh, ow


# --------------------------------------------------------------------------
# Forward (BayesianConv2d.convprobforward, non-MLE path, bias=None, groups=1)
# --------------------------------------------------------------------------
def bayesian_conv2d_forward(x, kl, conv_mean, conv_logvar, eps,
                            stride=(1, 1), padding=(0, 0), dilation=(1, 1)):
    # TODO(synk): groups != 1, the optional bias posterior, and the MLE
    # (weight = mu) branch of convprobforward are not implemented here.
    oc, icg, kh, kw = conv_mean.shape
    k = icg * kh * kw
    n = x.shape[0]

    # Lane-granularity padding only (waste bounded to <128 along each dim).
    k_pad = _round_up(k, 128)
    oc_pad = _round_up(oc, 128)

    # Sampled weight directly in (K_pad, OC_pad) bf16 layout + KL term.
    w_t, kl_delta = sample_weight_and_kl(conv_mean, conv_logvar, eps, k_pad, oc_pad)

    # im2col in bf16 (single HBM materialization of the inflated patches matrix).
    patches, oh, ow = _im2col(x.astype(jnp.bfloat16), kh, kw, stride, padding, dilation)
    m = patches.shape[0]

    # Pick an M tile against a VMEM budget that is safe on v7x (64 MiB/TC) and
    # comfortably within v5e/v6e (128 MiB). Conservatively count double buffers.
    budget = 48 * 1024 * 1024
    weight_bytes = 2 * k_pad * oc_pad * 2  # bf16, assume double-buffered
    tm = None
    for cand in (512, 384, 256, 128):
        t = min(cand, _round_up(m, 128))
        need = weight_bytes + 2 * t * k_pad * 2 + 2 * t * oc_pad * 2
        if need <= budget:
            tm = t
            break

    if tm is not None:
        m_pad = _round_up(m, tm)
        patches_p = jnp.pad(patches, ((0, m_pad - m), (0, k_pad - k)))
        out_flat = _conv_matmul_resident(patches_p, w_t, tm=tm)       # (m_pad, oc_pad) bf16
    else:
        # Filter too large for a VMEM-resident weight: K-tiled reduction fallback.
        tm = min(256, _round_up(m, 128))
        tn = _pick_block(oc_pad, 256)
        tk = _pick_block(k_pad, 512)
        m_pad = _round_up(m, tm)
        patches_p = jnp.pad(patches, ((0, m_pad - m), (0, k_pad - k)))
        out_flat = _conv_matmul_ktiled(patches_p, w_t, tm=tm, tn=tn, tk=tk)

    out = (out_flat[:m, :oc].astype(jnp.float32)
           .reshape(n, oh, ow, oc).transpose(0, 3, 1, 2))              # NCHW f32
    return out, kl + kl_delta


if __name__ == "__main__":
    # Small, module-consistent shapes
    N, IC, H, W = 2, 4, 16, 16
    OC, KH, KW = 8, 3, 3
    stride, padding, dilation = (1, 1), (0, 0), (1, 1)

    key = jax.random.PRNGKey(0)
    k_x, k_mean, k_logvar, k_eps = jax.random.split(key, 4)

    # reset_parameters(): stv = 1/sqrt(in_channels * KH * KW)
    stv = 1.0 / math.sqrt(IC * KH * KW)
    conv_mean = jax.random.uniform(k_mean, (OC, IC, KH, KW), jnp.float32, -stv, stv)
    conv_logvar = jax.random.uniform(k_logvar, (OC, IC, KH, KW), jnp.float32, -stv, stv) - 4.0

    x = jax.random.normal(k_x, (N, IC, H, W), jnp.float32)
    eps = jax.random.normal(k_eps, (OC, IC, KH, KW), jnp.float32)
    kl_in = jnp.float32(0.0)

    fwd = jax.jit(functools.partial(bayesian_conv2d_forward,
                                    stride=stride, padding=padding, dilation=dilation))
    out, kl_out = fwd(x, kl_in, conv_mean, conv_logvar, eps)
    out = jax.block_until_ready(out)
    kl_out = jax.block_until_ready(kl_out)

    # Correctness check against XLA conv (same bf16 operand precision) + direct KL.
    w_ref = conv_mean + jnp.exp(0.5 * conv_logvar) * eps
    out_ref = jax.lax.conv_general_dilated(
        x.astype(jnp.bfloat16), w_ref.astype(jnp.bfloat16),
        window_strides=stride, padding=[(0, 0), (0, 0)],
        rhs_dilation=dilation, dimension_numbers=("NCHW", "OIHW", "NCHW"),
        preferred_element_type=jnp.float32)

    log_q_ref = (-0.5 * LOG_2PI - 0.5 * conv_logvar
                 - (w_ref - conv_mean) ** 2 / (2.0 * jnp.exp(conv_logvar)))
    log_n1 = -0.5 * LOG_2PI - LOG_SIGMA1 - w_ref ** 2 / (2.0 * SIGMA1 ** 2)
    log_n2 = -0.5 * LOG_2PI - LOG_SIGMA2 - w_ref ** 2 / (2.0 * SIGMA2 ** 2)
    log_p_ref = jnp.logaddexp(math.log(PI) + log_n1, math.log(1.0 - PI) + log_n2)
    kl_ref = jnp.sum(log_q_ref - log_p_ref)

    assert out.shape == (N, OC, H - KH + 1, W - KW + 1)
    assert jnp.allclose(out, out_ref, rtol=2e-2, atol=2e-2)
    assert jnp.allclose(kl_out, kl_in + kl_ref, rtol=1e-3, atol=1e-2)

    print("KERNEL_OK")
</pallas_src>

<mosaic_0001>
module attributes {stable_mosaic.version = 11 : i64} {
  func.func @_sample_kl_kernel(%arg0: i32, %arg1: memref<128x128xf32, #tpu.memory_space<vmem>>, %arg2: memref<128x128xf32, #tpu.memory_space<vmem>>, %arg3: memref<128x128xf32, #tpu.memory_space<vmem>>, %arg4: memref<128x128xbf16, #tpu.memory_space<vmem>>, %arg5: memref<1x1xf32, #tpu.memory_space<smem>>, %arg6: memref<1xf32, #tpu.memory_space<smem>>) attributes {dimension_semantics = [#tpu.dimension_semantics<arbitrary>], iteration_bounds = array<i64: 1>, scalar_prefetch = 0 : i64, scratch_operands = 1 : i64, tpu.core_type = #tpu.core_type<tc>, window_params = [{transform_indices = @transform_0, window_bounds = array<i64: 128, 128>}, {transform_indices = @transform_1, window_bounds = array<i64: 128, 128>}, {transform_indices = @transform_2, window_bounds = array<i64: 128, 128>}, {transform_indices = @transform_3, window_bounds = array<i64: 128, 128>}, {transform_indices = @transform_4, window_bounds = array<i64: 1, 1>}]} {
    %c0 = arith.constant 0 : index
    %c0_0 = arith.constant 0 : index
    %0 = vector.load %arg1[%c0, %c0_0] : memref<128x128xf32, #tpu.memory_space<vmem>>, vector<128x128xf32>
    %c0_1 = arith.constant 0 : index
    %c0_2 = arith.constant 0 : index
    %1 = vector.load %arg2[%c0_1, %c0_2] : memref<128x128xf32, #tpu.memory_space<vmem>>, vector<128x128xf32>
    %c0_3 = arith.constant 0 : index
    %c0_4 = arith.constant 0 : index
    %2 = vector.load %arg3[%c0_3, %c0_4] : memref<128x128xf32, #tpu.memory_space<vmem>>, vector<128x128xf32>
    %cst = arith.constant 5.000000e-01 : f32
    %3 = vector.broadcast %cst : f32 to vector<128x128xf32>
    %4 = arith.mulf %3, %1 : vector<128x128xf32>
    %5 = math.exp %4 : vector<128x128xf32>
    %6 = arith.mulf %5, %2 : vector<128x128xf32>
    %7 = arith.addf %0, %6 : vector<128x128xf32>
    %8 = arith.truncf %7 : vector<128x128xf32> to vector<128x128xbf16>
    %c0_5 = arith.constant 0 : index
    %c0_6 = arith.constant 0 : index
    %9 = vector.load %arg4[%c0_5, %c0_6] : memref<128x128xbf16, #tpu.memory_space<vmem>>, vector<128x128xbf16>
    tpu.vector_store %arg4[%c0_5, %c0_6], %8 {strides = array<i32>} : memref<128x128xbf16, #tpu.memory_space<vmem>>, vector<128x128xbf16>,
    %10 = tpu.iota {dimensions = array<i32: 0>} : vector<128x128xi32>
    %c128_i32 = arith.constant 128 : i32
    %11 = arith.muli %arg0, %c128_i32 : i32
    %12 = vector.broadcast %11 : i32 to vector<128x128xi32>
    %13 = arith.addi %10, %12 : vector<128x128xi32>
    %14 = tpu.iota {dimensions = array<i32: 1>} : vector<128x128xi32>
    %c36_i32 = arith.constant 36 : i32
    %15 = vector.broadcast %c36_i32 : i32 to vector<128x128xi32>
    %16 = arith.cmpi slt, %13, %15 : vector<128x128xi32>
    %c8_i32 = arith.constant 8 : i32
    %17 = vector.broadcast %c8_i32 : i32 to vector<128x128xi32>
    %18 = arith.cmpi slt, %14, %17 : vector<128x128xi32>
    %19 = arith.andi %16, %18 : vector<128x128xi1>
    %cst_7 = arith.constant 1.000000e+00 : f32
    %cst_8 = arith.constant 0.000000e+00 : f32
    %20 = vector.broadcast %cst_7 : f32 to vector<128x128xf32>
    %21 = vector.broadcast %cst_8 : f32 to vector<128x128xf32>
    %22 = arith.select %19, %20, %21 : vector<128x128xi1>, vector<128x128xf32>
    %cst_9 = arith.constant 5.000000e-01 : f32
    %23 = vector.broadcast %cst_9 : f32 to vector<128x128xf32>
    %24 = arith.mulf %23, %1 : vector<128x128xf32>
    %cst_10 = arith.constant -0.918938517 : f32
    %25 = vector.broadcast %cst_10 : f32 to vector<128x128xf32>
    %26 = arith.subf %25, %24 : vector<128x128xf32>
    %cst_11 = arith.constant 5.000000e-01 : f32
    %27 = vector.broadcast %cst_11 : f32 to vector<128x128xf32>
    %28 = arith.mulf %27, %2 : vector<128x128xf32>
    %29 = arith.mulf %28, %2 : vector<128x128xf32>
    %30 = arith.subf %26, %29 : vector<128x128xf32>
    %31 = arith.mulf %7, %7 : vector<128x128xf32>
    %cst_12 = arith.constant 5.000000e-01 : f32
    %32 = vector.broadcast %cst_12 : f32 to vector<128x128xf32>
    %33 = arith.mulf %31, %32 : vector<128x128xf32>
    %cst_13 = arith.constant -0.918938517 : f32
    %34 = vector.broadcast %cst_13 : f32 to vector<128x128xf32>
    %35 = arith.subf %34, %33 : vector<128x128xf32>
    %cst_14 = arith.constant 81377.3984 : f32
    %36 = vector.broadcast %cst_14 : f32 to vector<128x128xf32>
    %37 = arith.mulf %31, %36 : vector<128x128xf32>
    %cst_15 = arith.constant 5.08106136 : f32
    %38 = vector.broadcast %cst_15 : f32 to vector<128x128xf32>
    %39 = arith.subf %38, %37 : vector<128x128xf32>
    %cst_16 = arith.constant -0.693147182 : f32
    %40 = vector.broadcast %cst_16 : f32 to vector<128x128xf32>
    %41 = arith.addf %40, %35 : vector<128x128xf32>
    %cst_17 = arith.constant -0.693147182 : f32
    %42 = vector.broadcast %cst_17 : f32 to vector<128x128xf32>
    %43 = arith.addf %42, %39 : vector<128x128xf32>
    %44 = arith.maximumf %41, %43 : vector<128x128xf32>
    %45 = arith.subf %41, %43 : vector<128x128xf32>
    %46 = arith.cmpf one, %45, %45 : vector<128x128xf32>
    %47 = arith.addf %41, %43 : vector<128x128xf32>
    %48 = math.absf %45 : vector<128x128xf32>
    %cst_18 = arith.constant 0.000000e+00 : f32
    %49 = vector.broadcast %cst_18 : f32 to vector<128x128xf32>
    %50 = arith.subf %49, %48 : vector<128x128xf32>
    %51 = math.exp %50 : vector<128x128xf32>
    %52 = math.log1p %51 : vector<128x128xf32>
    %53 = arith.addf %44, %52 : vector<128x128xf32>
    %54 = arith.select %46, %47, %53 : vector<128x128xi1>, vector<128x128xf32>
    %55 = arith.subf %30, %54 : vector<128x128xf32>
    %56 = arith.mulf %22, %55 : vector<128x128xf32>
    %57 = vector.shape_cast %56 : vector<128x128xf32> to vector<1x128x128xf32>
    %cst_19 = arith.constant dense<0.000000e+00> : vector<1xf32>
    %58 = vector.multi_reduction <add>, %57, %cst_19 [1, 2] : vector<1x128x128xf32> to vector<1xf32>
    %59 = vector.shape_cast %58 : vector<1xf32> to vector<1x1x1xf32>
    %60 = vector.extract %59[0, 0, 0] : f32 from vector<1x1x1xf32>
    %c0_i32 = arith.constant 0 : i32
    %61 = arith.cmpi eq, %arg0, %c0_i32 : i32
    %62 = arith.extui %61 : i1 to i32
    %c0_i32_20 = arith.constant 0 : i32
    %63 = arith.cmpi ne, %62, %c0_i32_20 : i32
    scf.if %63 {
      %cst_25 = arith.constant 0.000000e+00 : f32
      %c0_26 = arith.constant 0 : index
      %70 = memref.load %arg6[%c0_26] : memref<1xf32, #tpu.memory_space<smem>>
      memref.store %cst_25, %arg6[%c0_26] : memref<1xf32, #tpu.memory_space<smem>>
    } else {
    }
    %c0_21 = arith.constant 0 : index
    %64 = memref.load %arg6[%c0_21] : memref<1xf32, #tpu.memory_space<smem>>
    %65 = arith.addf %64, %60 : f32
    %c0_22 = arith.constant 0 : index
    %66 = memref.load %arg6[%c0_22] : memref<1xf32, #tpu.memory_space<smem>>
    memref.store %65, %arg6[%c0_22] : memref<1xf32, #tpu.memory_space<smem>>
    %c0_i32_23 = arith.constant 0 : i32
    %67 = arith.cmpi eq, %arg0, %c0_i32_23 : i32
    %68 = arith.extui %67 : i1 to i32
    %c0_i32_24 = arith.constant 0 : i32
    %69 = arith.cmpi ne, %68, %c0_i32_24 : i32
    scf.if %69 {
      %c0_25 = arith.constant 0 : index
      %70 = memref.load %arg6[%c0_25] : memref<1xf32, #tpu.memory_space<smem>>
      %c0_26 = arith.constant 0 : index
      %c0_27 = arith.constant 0 : index
      %71 = memref.load %arg5[%c0_26, %c0_27] : memref<1x1xf32, #tpu.memory_space<smem>>
      memref.store %70, %arg5[%c0_26, %c0_27] : memref<1x1xf32, #tpu.memory_space<smem>>
    } else {
    }
    return
  }
  func.func @transform_0(%arg0: i32) -> (i32, i32) {
    %c0_i32 = arith.constant 0 : i32
    %c0_i32_0 = arith.constant 0 : i32
    return %arg0, %c0_i32 : i32, i32
  }
  func.func @transform_1(%arg0: i32) -> (i32, i32) {
    %c0_i32 = arith.constant 0 : i32
    %c0_i32_0 = arith.constant 0 : i32
    return %arg0, %c0_i32 : i32, i32
  }
  func.func @transform_2(%arg0: i32) -> (i32, i32) {
    %c0_i32 = arith.constant 0 : i32
    %c0_i32_0 = arith.constant 0 : i32
    return %arg0, %c0_i32 : i32, i32
  }
  func.func @transform_3(%arg0: i32) -> (i32, i32) {
    %c0_i32 = arith.constant 0 : i32
    %c0_i32_0 = arith.constant 0 : i32
    return %arg0, %c0_i32 : i32, i32
  }
  func.func @transform_4(%arg0: i32) -> (i32, i32) {
    %c0_i32 = arith.constant 0 : i32
    %c0_i32_0 = arith.constant 0 : i32
    %c0_i32_1 = arith.constant 0 : i32
    return %c0_i32, %c0_i32_0 : i32, i32
  }
}

module attributes {stable_mosaic.version = 11 : i64} {
  func.func @_matmul_resident_kernel(%arg0: i32, %arg1: memref<512x128xbf16, #tpu.memory_space<vmem>>, %arg2: memref<128x128xbf16, #tpu.memory_space<vmem>>, %arg3: memref<512x128xbf16, #tpu.memory_space<vmem>>) attributes {dimension_semantics = [#tpu.dimension_semantics<parallel>], iteration_bounds = array<i64: 1>, scalar_prefetch = 0 : i64, scratch_operands = 0 : i64, tpu.core_type = #tpu.core_type<tc>, window_params = [{transform_indices = @transform_0, window_bounds = array<i64: 512, 128>}, {pipeline_mode = #tpu.pipeline_mode<synchronous>, transform_indices = @transform_1, window_bounds = array<i64: 128, 128>}, {transform_indices = @transform_2, window_bounds = array<i64: 512, 128>}]} {
    %c0 = arith.constant 0 : index
    %c0_0 = arith.constant 0 : index
    %0 = vector.load %arg1[%c0, %c0_0] : memref<512x128xbf16, #tpu.memory_space<vmem>>, vector<512x128xbf16>
    %c0_1 = arith.constant 0 : index
    %c0_2 = arith.constant 0 : index
    %1 = vector.load %arg2[%c0_1, %c0_2] : memref<128x128xbf16, #tpu.memory_space<vmem>>, vector<128x128xbf16>
    %cst = arith.constant dense<0.000000e+00> : vector<512x128xf32>
    %2 = tpu.matmul %0, %1, %cst {dimension_numbers = #tpu.dot_dimension_numbers<[1], [0], [0], [1], [0, 0, 1, 1], [], []>} : vector<512x128xbf16>, vector<128x128xbf16>, vector<512x128xf32> -> vector<512x128xf32>
    %3 = arith.truncf %2 : vector<512x128xf32> to vector<512x128xbf16>
    %c0_3 = arith.constant 0 : index
    %c0_4 = arith.constant 0 : index
    %4 = vector.load %arg3[%c0_3, %c0_4] : memref<512x128xbf16, #tpu.memory_space<vmem>>, vector<512x128xbf16>
    tpu.vector_store %arg3[%c0_3, %c0_4], %3 {strides = array<i32>} : memref<512x128xbf16, #tpu.memory_space<vmem>>, vector<512x128xbf16>,
    return
  }
  func.func @transform_0(%arg0: i32) -> (i32, i32) {
    %c0_i32 = arith.constant 0 : i32
    %c0_i32_0 = arith.constant 0 : i32
    return %arg0, %c0_i32 : i32, i32
  }
  func.func @transform_1(%arg0: i32) -> (i32, i32) {
    %c0_i32 = arith.constant 0 : i32
    %c0_i32_0 = arith.constant 0 : i32
    %c0_i32_1 = arith.constant 0 : i32
    return %c0_i32, %c0_i32_0 : i32, i32
  }
  func.func @transform_2(%arg0: i32) -> (i32, i32) {
    %c0_i32 = arith.constant 0 : i32
    %c0_i32_0 = arith.constant 0 : i32
    return %arg0, %c0_i32 : i32, i32
  }
}

</mosaic_0001>

<llo_original>
// kernel: bayesian_conv2d_forward.2
$region0: #{bayesian_conv2d_forward.2}
  #allocation0 [shape = 'u32[]', space=smem, size = 0x4, offset = 0x4, fixed_abs, tag = 'smem constant byte address 0x4 - core index']
  #allocation1 [shape = 'u32[72,128]{1,0:T(1,128)}', space=vmem, size = 0x9000, scoped, tag = 'internal scratch']
  #allocation2 [shape = 'f32[1]{0:T(128)}', space=smem, size = 0x200, scoped, tag = 'scratch operand']
  %s0 = inlined_call_operand.vmem [shape: f32[128,128], index: 0, kind: input, shape index: {}]
  %s1 = inlined_call_operand.vmem [shape: f32[128,128], index: 1, kind: input, shape index: {}]
  %s2 = inlined_call_operand.vmem [shape: f32[128,128], index: 2, kind: input, shape index: {}]
  %s3 = inlined_call_operand.vmem [shape: bf16[128,128], index: 3, kind: output, shape index: {0}]
  %s4 = inlined_call_operand.hbm [shape: f32[1,1], index: 4, kind: output, shape index: {1}]
  %5 = xla_tuple %s3, %s4
  %s6 = sld [smem:[#allocation0]]
  $region38: #{bayesian_conv2d_forward.2} parent=0
    _
  %s8 = ssub.s32 1, %s6
  %s9 = scalar_select 0, %s8, %s6
  $region1: #{bayesian_conv2d_forward.2} parent=0
    #allocation3 [shape = 'u8[512]{0}', space=smem, size = 0x200, scoped, tag = 'output window, operand 1, single buffered']
    #allocation4 [shape = 's32[1]{0}', space=sflag, size = 0x4, scoped, tag = 'scoped memory for bayesian_conv2d_forward.2']
    %10 = vsyncpa [#allocation4], 0
    // Predicated region
    $region2: #{bayesian_conv2d_forward.2} parent=1 // pred_check
      _
    $region3: #{bayesian_conv2d_forward.2} parent=1 // pred_check_branch
      %12 = sbr.rel (0) target = $region5
    $region4: #{bayesian_conv2d_forward.2} parent=1 // pred_region
      _
    $region5: #{bayesian_conv2d_forward.2} parent=1 // pred_fallthru
      _
    // Predicated region
    $region6: #{bayesian_conv2d_forward.2} parent=1 // pred_check
      _
    $region7: #{bayesian_conv2d_forward.2} parent=1 // pred_check_branch
      %14 = sbr.rel (0) target = $region9
    $region8: #{bayesian_conv2d_forward.2} parent=1 // pred_region
      _
    $region9: #{bayesian_conv2d_forward.2} parent=1 // pred_fallthru
      _
    // Predicated region
    $region10: #{bayesian_conv2d_forward.2} parent=1 // pred_check
      _
    $region11: #{bayesian_conv2d_forward.2} parent=1 // pred_check_branch
      %16 = sbr.rel (0) target = $region13
    $region12: #{bayesian_conv2d_forward.2} parent=1 // pred_region
      _
    $region13: #{bayesian_conv2d_forward.2} parent=1 // pred_fallthru
      _
    %v17 = vld [vmem:[%s0] sm:$0xff]
    %v18 = vld [vmem:[%s0 + $0x8] sm:$0xff]
    %v19 = vld [vmem:[%s0 + $0x10] sm:$0xff]
    %v20 = vld [vmem:[%s0 + $0x18] sm:$0xff]
    %v21 = vld [vmem:[%s0 + $0x20] sm:$0xff]
    %v22 = vld [vmem:[%s0 + $0x28] sm:$0xff]
    %v23 = vld [vmem:[%s0 + $0x30] sm:$0xff]
    %v24 = vld [vmem:[%s0 + $0x38] sm:$0xff]
    %v25 = vld [vmem:[%s0 + $0x40] sm:$0xff]
    %v26 = vld [vmem:[%s0 + $0x48] sm:$0xff]
    %v27 = vld [vmem:[%s0 + $0x50] sm:$0xff]
    %v28 = vld [vmem:[%s0 + $0x58] sm:$0xff]
    %v29 = vld [vmem:[%s0 + $0x60] sm:$0xff]
    %v30 = vld [vmem:[%s0 + $0x68] sm:$0xff]
    %v31 = vld [vmem:[%s0 + $0x70] sm:$0xff]
    %v32 = vld [vmem:[%s0 + $0x78] sm:$0xff]
    %v33 = vld [vmem:[%s1] sm:$0xff]
    %v34 = vld [vmem:[%s1 + $0x8] sm:$0xff]
    %v35 = vld [vmem:[%s1 + $0x10] sm:$0xff]
    %v36 = vld [vmem:[%s1 + $0x18] sm:$0xff]
    %v37 = vld [vmem:[%s1 + $0x20] sm:$0xff]
    %v38 = vld [vmem:[%s1 + $0x28] sm:$0xff]
    %v39 = vld [vmem:[%s1 + $0x30] sm:$0xff]
    %v40 = vld [vmem:[%s1 + $0x38] sm:$0xff]
    %v41 = vld [vmem:[%s1 + $0x40] sm:$0xff]
    %v42 = vld [vmem:[%s1 + $0x48] sm:$0xff]
    %v43 = vld [vmem:[%s1 + $0x50] sm:$0xff]
    %v44 = vld [vmem:[%s1 + $0x58] sm:$0xff]
    %v45 = vld [vmem:[%s1 + $0x60] sm:$0xff]
    %v46 = vld [vmem:[%s1 + $0x68] sm:$0xff]
    %v47 = vld [vmem:[%s1 + $0x70] sm:$0xff]
    %v48 = vld [vmem:[%s1 + $0x78] sm:$0xff]
    %v49 = vld [vmem:[%s2] sm:$0xff]
    %v50 = vld [vmem:[%s2 + $0x8] sm:$0xff]
    %v51 = vld [vmem:[%s2 + $0x10] sm:$0xff]
    %v52 = vld [vmem:[%s2 + $0x18] sm:$0xff]
    %v53 = vld [vmem:[%s2 + $0x20] sm:$0xff]
    %v54 = vld [vmem:[%s2 + $0x28] sm:$0xff]
    %v55 = vld [vmem:[%s2 + $0x30] sm:$0xff]
    %v56 = vld [vmem:[%s2 + $0x38] sm:$0xff]
    %v57 = vld [vmem:[%s2 + $0x40] sm:$0xff]
    %v58 = vld [vmem:[%s2 + $0x48] sm:$0xff]
    %v59 = vld [vmem:[%s2 + $0x50] sm:$0xff]
    %v60 = vld [vmem:[%s2 + $0x58] sm:$0xff]
    %v61 = vld [vmem:[%s2 + $0x60] sm:$0xff]
    %v62 = vld [vmem:[%s2 + $0x68] sm:$0xff]
    %v63 = vld [vmem:[%s2 + $0x70] sm:$0xff]
    %v64 = vld [vmem:[%s2 + $0x78] sm:$0xff]
    %v65 = vmul.f32 %v33, 0.5
    %v66 = vmul.f32 %v34, 0.5
    %v67 = vmul.f32 %v35, 0.5
    %v68 = vmul.f32 %v36, 0.5
    %v69 = vmul.f32 %v37, 0.5
    %v70 = vmul.f32 %v38, 0.5
    %v71 = vmul.f32 %v39, 0.5
    %v72 = vmul.f32 %v40, 0.5
    %v73 = vmul.f32 %v41, 0.5
    %v74 = vmul.f32 %v42, 0.5
    %v75 = vmul.f32 %v43, 0.5
    %v76 = vmul.f32 %v44, 0.5
    %v77 = vmul.f32 %v45, 0.5
    %v78 = vmul.f32 %v46, 0.5
    %v79 = vmul.f32 %v47, 0.5
    %v80 = vmul.f32 %v48, 0.5
    %v81 = vmul.f32 %v65, 1.442695
    %v82 = vpow.pop %v81
    %v83 = vmul.f32 %v66, 1.442695
    %v84 = vpow.pop %v83
    %v85 = vmul.f32 %v67, 1.442695
    %v86 = vpow.pop %v85
    %v87 = vmul.f32 %v68, 1.442695
    %v88 = vpow.pop %v87
    %v89 = vmul.f32 %v69, 1.442695
    %v90 = vpow.pop %v89
    %v91 = vmul.f32 %v70, 1.442695
    %v92 = vpow.pop %v91
    %v93 = vmul.f32 %v71, 1.442695
    %v94 = vpow.pop %v93
    %v95 = vmul.f32 %v72, 1.442695
    %v96 = vpow.pop %v95
    %v97 = vmul.f32 %v73, 1.442695
    %v98 = vpow.pop %v97
    %v99 = vmul.f32 %v74, 1.442695
    %v100 = vpow.pop %v99
    %v101 = vmul.f32 %v75, 1.442695
    %v102 = vpow.pop %v101
    %v103 = vmul.f32 %v76, 1.442695
    %v104 = vpow.pop %v103
    %v105 = vmul.f32 %v77, 1.442695
    %v106 = vpow.pop %v105
    %v107 = vmul.f32 %v78, 1.442695
    %v108 = vpow.pop %v107
    %v109 = vmul.f32 %v79, 1.442695
    %v110 = vpow.pop %v109
    %v111 = vmul.f32 %v80, 1.442695
    %v112 = vpow.pop %v111
    %v113 = vmul.f32 %v82, %v49
    %v114 = vmul.f32 %v84, %v50
    %v115 = vmul.f32 %v86, %v51
    %v116 = vmul.f32 %v88, %v52
    %v117 = vmul.f32 %v90, %v53
    %v118 = vmul.f32 %v92, %v54
    %v119 = vmul.f32 %v94, %v55
    %v120 = vmul.f32 %v96, %v56
    %v121 = vmul.f32 %v98, %v57
    %v122 = vmul.f32 %v100, %v58
    %v123 = vmul.f32 %v102, %v59
    %v124 = vmul.f32 %v104, %v60
    %v125 = vmul.f32 %v106, %v61
    %v126 = vmul.f32 %v108, %v62
    %v127 = vmul.f32 %v110, %v63
    %v128 = vmul.f32 %v112, %v64
    %v129 = vadd.f32 %v17, %v113
    %v130 = vadd.f32 %v18, %v114
    %v131 = vadd.f32 %v19, %v115
    %v132 = vadd.f32 %v20, %v116
    %v133 = vadd.f32 %v21, %v117
    %v134 = vadd.f32 %v22, %v118
    %v135 = vadd.f32 %v23, %v119
    %v136 = vadd.f32 %v24, %v120
    %v137 = vadd.f32 %v25, %v121
    %v138 = vadd.f32 %v26, %v122
    %v139 = vadd.f32 %v27, %v123
    %v140 = vadd.f32 %v28, %v124
    %v141 = vadd.f32 %v29, %v125
    %v142 = vadd.f32 %v30, %v126
    %v143 = vadd.f32 %v31, %v127
    %v144 = vadd.f32 %v32, %v128
    %v145 = vpack.c.bf16 %v129, %v129
    %v146 = vpack.c.bf16 %v130, %v130
    %v147 = vpack.c.bf16 %v131, %v131
    %v148 = vpack.c.bf16 %v132, %v132
    %v149 = vpack.c.bf16 %v133, %v133
    %v150 = vpack.c.bf16 %v134, %v134
    %v151 = vpack.c.bf16 %v135, %v135
    %v152 = vpack.c.bf16 %v136, %v136
    %v153 = vpack.c.bf16 %v137, %v137
    %v154 = vpack.c.bf16 %v138, %v138
    %v155 = vpack.c.bf16 %v139, %v139
    %v156 = vpack.c.bf16 %v140, %v140
    %v157 = vpack.c.bf16 %v141, %v141
    %v158 = vpack.c.bf16 %v142, %v142
    %v159 = vpack.c.bf16 %v143, %v143
    %v160 = vpack.c.bf16 %v144, %v144
    %161 = vst [vmem:[%s3] sm:$0xf] %v145
    %162 = vst [vmem:[%s3 + $0x4] sm:$0xf] %v146
    %163 = vst [vmem:[%s3 + $0x8] sm:$0xf] %v147
    %164 = vst [vmem:[%s3 + $0xc] sm:$0xf] %v148
    %165 = vst [vmem:[%s3 + $0x10] sm:$0xf] %v149
    %166 = vst [vmem:[%s3 + $0x14] sm:$0xf] %v150
    %167 = vst [vmem:[%s3 + $0x18] sm:$0xf] %v151
    %168 = vst [vmem:[%s3 + $0x1c] sm:$0xf] %v152
    %169 = vst [vmem:[%s3 + $0x20] sm:$0xf] %v153
    %170 = vst [vmem:[%s3 + $0x24] sm:$0xf] %v154
    %171 = vst [vmem:[%s3 + $0x28] sm:$0xf] %v155
    %172 = vst [vmem:[%s3 + $0x2c] sm:$0xf] %v156
    %173 = vst [vmem:[%s3 + $0x30] sm:$0xf] %v157
    %174 = vst [vmem:[%s3 + $0x34] sm:$0xf] %v158
    %175 = vst [vmem:[%s3 + $0x38] sm:$0xf] %v159
    %176 = vst [vmem:[%s3 + $0x3c] sm:$0xf] %v160
    %v177 = vlaneseq
    %v178 = vshrl.u32 %v177, 7
    %v179 = vadd.s32 %v178, 8
    %v180 = vadd.s32 %v178, 16
    %v181 = vadd.s32 %v178, 24
    %v182 = vadd.s32 %v178, 32
    %v183 = vadd.s32 %v178, 40
    %v184 = vadd.s32 %v178, 48
    %v185 = vadd.s32 %v178, 56
    %v186 = vadd.s32 %v178, 64
    %v187 = vadd.s32 %v178, 72
    %v188 = vadd.s32 %v178, 80
    %v189 = vadd.s32 %v178, 88
    %v190 = vadd.s32 %v178, 96
    %v191 = vadd.s32 %v178, 104
    %v192 = vadd.s32 %v178, 112
    %v193 = vadd.s32 %v178, 120
    %s194 = smul.u32 0, 128
    %v195 = vstv %s194
    %v196 = vadd.s32 %v178, %v195
    %v197 = vadd.s32 %v179, %v195
    %v198 = vadd.s32 %v180, %v195
    %v199 = vadd.s32 %v181, %v195
    %v200 = vadd.s32 %v182, %v195
    %v201 = vadd.s32 %v183, %v195
    %v202 = vadd.s32 %v184, %v195
    %v203 = vadd.s32 %v185, %v195
    %v204 = vadd.s32 %v186, %v195
    %v205 = vadd.s32 %v187, %v195
    %v206 = vadd.s32 %v188, %v195
    %v207 = vadd.s32 %v189, %v195
    %v208 = vadd.s32 %v190, %v195
    %v209 = vadd.s32 %v191, %v195
    %v210 = vadd.s32 %v192, %v195
    %v211 = vadd.s32 %v193, %v195
    %v212 = vlaneseq
    %v213 = vand.u32 %v212, 127
    %vm214 = vcmp.lt.s32.totalorder %v196, 36
    %vm215 = vcmp.lt.s32.totalorder %v197, 36
    %vm216 = vcmp.lt.s32.totalorder %v198, 36
    %vm217 = vcmp.lt.s32.totalorder %v199, 36
    %vm218 = vcmp.lt.s32.totalorder %v200, 36
    %vm219 = vcmp.lt.s32.totalorder %v201, 36
    %vm220 = vcmp.lt.s32.totalorder %v202, 36
    %vm221 = vcmp.lt.s32.totalorder %v203, 36
    %vm222 = vcmp.lt.s32.totalorder %v204, 36
    %vm223 = vcmp.lt.s32.totalorder %v205, 36
    %vm224 = vcmp.lt.s32.totalorder %v206, 36
    %vm225 = vcmp.lt.s32.totalorder %v207, 36
    %vm226 = vcmp.lt.s32.totalorder %v208, 36
    %vm227 = vcmp.lt.s32.totalorder %v209, 36
    %vm228 = vcmp.lt.s32.totalorder %v210, 36
    %vm229 = vcmp.lt.s32.totalorder %v211, 36
    %vm230 = vcmp.lt.s32.totalorder %v213, 8
    %vm231 = vmand %vm214, %vm230
    %vm232 = vmand %vm215, %vm230
    %vm233 = vmand %vm216, %vm230
    %vm234 = vmand %vm217, %vm230
    %vm235 = vmand %vm218, %vm230
    %vm236 = vmand %vm219, %vm230
    %vm237 = vmand %vm220, %vm230
    %vm238 = vmand %vm221, %vm230
    %vm239 = vmand %vm222, %vm230
    %vm240 = vmand %vm223, %vm230
    %vm241 = vmand %vm224, %vm230
    %vm242 = vmand %vm225, %vm230
    %vm243 = vmand %vm226, %vm230
    %vm244 = vmand %vm227, %vm230
    %vm245 = vmand %vm228, %vm230
    %vm246 = vmand %vm229, %vm230
    %v247 = vsel %vm231, 1.0, 0.0
    %v248 = vsel %vm232, 1.0, 0.0
    %v249 = vsel %vm233, 1.0, 0.0
    %v250 = vsel %vm234, 1.0, 0.0
    %v251 = vsel %vm235, 1.0, 0.0
    %v252 = vsel %vm236, 1.0, 0.0
    %v253 = vsel %vm237, 1.0, 0.0
    %v254 = vsel %vm238, 1.0, 0.0
    %v255 = vsel %vm239, 1.0, 0.0
    %v256 = vsel %vm240, 1.0, 0.0
    %v257 = vsel %vm241, 1.0, 0.0
    %v258 = vsel %vm242, 1.0, 0.0
    %v259 = vsel %vm243, 1.0, 0.0
    %v260 = vsel %vm244, 1.0, 0.0
    %v261 = vsel %vm245, 1.0, 0.0
    %v262 = vsel %vm246, 1.0, 0.0
    %v263 = vsub.f32 -0.9189385, %v65
    %v264 = vsub.f32 -0.9189385, %v66
    %v265 = vsub.f32 -0.9189385, %v67
    %v266 = vsub.f32 -0.9189385, %v68
    %v267 = vsub.f32 -0.9189385, %v69
    %v268 = vsub.f32 -0.9189385, %v70
    %v269 = vsub.f32 -0.9189385, %v71
    %v270 = vsub.f32 -0.9189385, %v72
    %v271 = vsub.f32 -0.9189385, %v73
    %v272 = vsub.f32 -0.9189385, %v74
    %v273 = vsub.f32 -0.9189385, %v75
    %v274 = vsub.f32 -0.9189385, %v76
    %v275 = vsub.f32 -0.9189385, %v77
    %v276 = vsub.f32 -0.9189385, %v78
    %v277 = vsub.f32 -0.9189385, %v79
    %v278 = vsub.f32 -0.9189385, %v80
    %v279 = vmul.f32 %v49, 0.5
    %v280 = vmul.f32 %v50, 0.5
    %v281 = vmul.f32 %v51, 0.5
    %v282 = vmul.f32 %v52, 0.5
    %v283 = vmul.f32 %v53, 0.5
    %v284 = vmul.f32 %v54, 0.5
    %v285 = vmul.f32 %v55, 0.5
    %v286 = vmul.f32 %v56, 0.5
    %v287 = vmul.f32 %v57, 0.5
    %v288 = vmul.f32 %v58, 0.5
    %v289 = vmul.f32 %v59, 0.5
    %v290 = vmul.f32 %v60, 0.5
    %v291 = vmul.f32 %v61, 0.5
    %v292 = vmul.f32 %v62, 0.5
    %v293 = vmul.f32 %v63, 0.5
    %v294 = vmul.f32 %v64, 0.5
    %v295 = vmul.f32 %v279, %v49
    %v296 = vmul.f32 %v280, %v50
    %v297 = vmul.f32 %v281, %v51
    %v298 = vmul.f32 %v282, %v52
    %v299 = vmul.f32 %v283, %v53
    %v300 = vmul.f32 %v284, %v54
    %v301 = vmul.f32 %v285, %v55
    %v302 = vmul.f32 %v286, %v56
    %v303 = vmul.f32 %v287, %v57
    %v304 = vmul.f32 %v288, %v58
    %v305 = vmul.f32 %v289, %v59
    %v306 = vmul.f32 %v290, %v60
    %v307 = vmul.f32 %v291, %v61
    %v308 = vmul.f32 %v292, %v62
    %v309 = vmul.f32 %v293, %v63
    %v310 = vmul.f32 %v294, %v64
    %v311 = vsub.f32 %v263, %v295
    %v312 = vsub.f32 %v264, %v296
    %v313 = vsub.f32 %v265, %v297
    %v314 = vsub.f32 %v266, %v298
    %v315 = vsub.f32 %v267, %v299
    %v316 = vsub.f32 %v268, %v300
    %v317 = vsub.f32 %v269, %v301
    %v318 = vsub.f32 %v270, %v302
    %v319 = vsub.f32 %v271, %v303
    %v320 = vsub.f32 %v272, %v304
    %v321 = vsub.f32 %v273, %v305
    %v322 = vsub.f32 %v274, %v306
    %v323 = vsub.f32 %v275, %v307
    %v324 = vsub.f32 %v276, %v308
    %v325 = vsub.f32 %v277, %v309
    %v326 = vsub.f32 %v278, %v310
    %v327 = vmul.f32 %v129, %v129
    %v328 = vmul.f32 %v130, %v130
    %v329 = vmul.f32 %v131, %v131
    %v330 = vmul.f32 %v132, %v132
    %v331 = vmul.f32 %v133, %v133
    %v332 = vmul.f32 %v134, %v134
    %v333 = vmul.f32 %v135, %v135
    %v334 = vmul.f32 %v136, %v136
    %v335 = vmul.f32 %v137, %v137
    %v336 = vmul.f32 %v138, %v138
    %v337 = vmul.f32 %v139, %v139
    %v338 = vmul.f32 %v140, %v140
    %v339 = vmul.f32 %v141, %v141
    %v340 = vmul.f32 %v142, %v142
    %v341 = vmul.f32 %v143, %v143
    %v342 = vmul.f32 %v144, %v144
    %v343 = vmul.f32 %v327, 0.5
    %v344 = vmul.f32 %v328, 0.5
    %v345 = vmul.f32 %v329, 0.5
    %v346 = vmul.f32 %v330, 0.5
    %v347 = vmul.f32 %v331, 0.5
    %v348 = vmul.f32 %v332, 0.5
    %v349 = vmul.f32 %v333, 0.5
    %v350 = vmul.f32 %v334, 0.5
    %v351 = vmul.f32 %v335, 0.5
    %v352 = vmul.f32 %v336, 0.5
    %v353 = vmul.f32 %v337, 0.5
    %v354 = vmul.f32 %v338, 0.5
    %v355 = vmul.f32 %v339, 0.5
    %v356 = vmul.f32 %v340, 0.5
    %v357 = vmul.f32 %v341, 0.5
    %v358 = vmul.f32 %v342, 0.5
    %v359 = vsub.f32 -0.9189385, %v343
    %v360 = vsub.f32 -0.9189385, %v344
    %v361 = vsub.f32 -0.9189385, %v345
    %v362 = vsub.f32 -0.9189385, %v346
    %v363 = vsub.f32 -0.9189385, %v347
    %v364 = vsub.f32 -0.9189385, %v348
    %v365 = vsub.f32 -0.9189385, %v349
    %v366 = vsub.f32 -0.9189385, %v350
    %v367 = vsub.f32 -0.9189385, %v351
    %v368 = vsub.f32 -0.9189385, %v352
    %v369 = vsub.f32 -0.9189385, %v353
    %v370 = vsub.f32 -0.9189385, %v354
    %v371 = vsub.f32 -0.9189385, %v355
    %v372 = vsub.f32 -0.9189385, %v356
    %v373 = vsub.f32 -0.9189385, %v357
    %v374 = vsub.f32 -0.9189385, %v358
    %v375 = vmul.f32 %v327, 81377.4
    %v376 = vmul.f32 %v328, 81377.4
    %v377 = vmul.f32 %v329, 81377.4
    %v378 = vmul.f32 %v330, 81377.4
    %v379 = vmul.f32 %v331, 81377.4
    %v380 = vmul.f32 %v332, 81377.4
    %v381 = vmul.f32 %v333, 81377.4
    %v382 = vmul.f32 %v334, 81377.4
    %v383 = vmul.f32 %v335, 81377.4
    %v384 = vmul.f32 %v336, 81377.4
    %v385 = vmul.f32 %v337, 81377.4
    %v386 = vmul.f32 %v338, 81377.4
    %v387 = vmul.f32 %v339, 81377.4
    %v388 = vmul.f32 %v340, 81377.4
    %v389 = vmul.f32 %v341, 81377.4
    %v390 = vmul.f32 %v342, 81377.4
    %v391 = vsub.f32 5.0810614, %v375
    %v392 = vsub.f32 5.0810614, %v376
    %v393 = vsub.f32 5.0810614, %v377
    %v394 = vsub.f32 5.0810614, %v378
    %v395 = vsub.f32 5.0810614, %v379
    %v396 = vsub.f32 5.0810614, %v380
    %v397 = vsub.f32 5.0810614, %v381
    %v398 = vsub.f32 5.0810614, %v382
    %v399 = vsub.f32 5.0810614, %v383
    %v400 = vsub.f32 5.0810614, %v384
    %v401 = vsub.f32 5.0810614, %v385
    %v402 = vsub.f32 5.0810614, %v386
    %v403 = vsub.f32 5.0810614, %v387
    %v404 = vsub.f32 5.0810614, %v388
    %v405 = vsub.f32 5.0810614, %v389
    %v406 = vsub.f32 5.0810614, %v390
    %v407 = vadd.f32 %v359, -0.6931472
    %v408 = vadd.f32 %v360, -0.6931472
    %v409 = vadd.f32 %v361, -0.6931472
    %v410 = vadd.f32 %v362, -0.6931472
    %v411 = vadd.f32 %v363, -0.6931472
    %v412 = vadd.f32 %v364, -0.6931472
    %v413 = vadd.f32 %v365, -0.6931472
    %v414 = vadd.f32 %v366, -0.6931472
    %v415 = vadd.f32 %v367, -0.6931472
    %v416 = vadd.f32 %v368, -0.6931472
    %v417 = vadd.f32 %v369, -0.6931472
    %v418 = vadd.f32 %v370, -0.6931472
    %v419 = vadd.f32 %v371, -0.6931472
    %v420 = vadd.f32 %v372, -0.6931472
    %v421 = vadd.f32 %v373, -0.6931472
    %v422 = vadd.f32 %v374, -0.6931472
    %v423 = vadd.f32 %v391, -0.6931472
    %v424 = vadd.f32 %v392, -0.6931472
    %v425 = vadd.f32 %v393, -0.6931472
    %v426 = vadd.f32 %v394, -0.6931472
    %v427 = vadd.f32 %v395, -0.6931472
    %v428 = vadd.f32 %v396, -0.6931472
    %v429 = vadd.f32 %v397, -0.6931472
    %v430 = vadd.f32 %v398, -0.6931472
    %v431 = vadd.f32 %v399, -0.6931472
    %v432 = vadd.f32 %v400, -0.6931472
    %v433 = vadd.f32 %v401, -0.6931472
    %v434 = vadd.f32 %v402, -0.6931472
    %v435 = vadd.f32 %v403, -0.6931472
    %v436 = vadd.f32 %v404, -0.6931472
    %v437 = vadd.f32 %v405, -0.6931472
    %v438 = vadd.f32 %v406, -0.6931472
    %v439 = vmax.f32 %v407, %v423
    %v440 = vmax.f32 %v408, %v424
    %v441 = vmax.f32 %v409, %v425
    %v442 = vmax.f32 %v410, %v426
    %v443 = vmax.f32 %v411, %v427
    %v444 = vmax.f32 %v412, %v428
    %v445 = vmax.f32 %v413, %v429
    %v446 = vmax.f32 %v414, %v430
    %v447 = vmax.f32 %v415, %v431
    %v448 = vmax.f32 %v416, %v432
    %v449 = vmax.f32 %v417, %v433
    %v450 = vmax.f32 %v418, %v434
    %v451 = vmax.f32 %v419, %v435
    %v452 = vmax.f32 %v420, %v436
    %v453 = vmax.f32 %v421, %v437
    %v454 = vmax.f32 %v422, %v438
    %v455 = vsub.f32 %v407, %v423
    %v456 = vsub.f32 %v408, %v424
    %v457 = vsub.f32 %v409, %v425
    %v458 = vsub.f32 %v410, %v426
    %v459 = vsub.f32 %v411, %v427
    %v460 = vsub.f32 %v412, %v428
    %v461 = vsub.f32 %v413, %v429
    %v462 = vsub.f32 %v414, %v430
    %v463 = vsub.f32 %v415, %v431
    %v464 = vsub.f32 %v416, %v432
    %v465 = vsub.f32 %v417, %v433
    %v466 = vsub.f32 %v418, %v434
    %v467 = vsub.f32 %v419, %v435
    %v468 = vsub.f32 %v420, %v436
    %v469 = vsub.f32 %v421, %v437
    %v470 = vsub.f32 %v422, %v438
    %vm471 = vcmp.ne.f32.partialorder %v455, %v455
    %vm472 = vcmp.ne.f32.partialorder %v456, %v456
    %vm473 = vcmp.ne.f32.partialorder %v457, %v457
    %vm474 = vcmp.ne.f32.partialorder %v458, %v458
    %vm475 = vcmp.ne.f32.partialorder %v459, %v459
    %vm476 = vcmp.ne.f32.partialorder %v460, %v460
    %vm477 = vcmp.ne.f32.partialorder %v461, %v461
    %vm478 = vcmp.ne.f32.partialorder %v462, %v462
    %vm479 = vcmp.ne.f32.partialorder %v463, %v463
    %vm480 = vcmp.ne.f32.partialorder %v464, %v464
    %vm481 = vcmp.ne.f32.partialorder %v465, %v465
    %vm482 = vcmp.ne.f32.partialorder %v466, %v466
    %vm483 = vcmp.ne.f32.partialorder %v467, %v467
    %vm484 = vcmp.ne.f32.partialorder %v468, %v468
    %vm485 = vcmp.ne.f32.partialorder %v469, %v469
    %vm486 = vcmp.ne.f32.partialorder %v470, %v470
    %v487 = vadd.f32 %v407, %v423
    %v488 = vadd.f32 %v408, %v424
    %v489 = vadd.f32 %v409, %v425
    %v490 = vadd.f32 %v410, %v426
    %v491 = vadd.f32 %v411, %v427
    %v492 = vadd.f32 %v412, %v428
    %v493 = vadd.f32 %v413, %v429
    %v494 = vadd.f32 %v414, %v430
    %v495 = vadd.f32 %v415, %v431
    %v496 = vadd.f32 %v416, %v432
    %v497 = vadd.f32 %v417, %v433
    %v498 = vadd.f32 %v418, %v434
    %v499 = vadd.f32 %v419, %v435
    %v500 = vadd.f32 %v420, %v436
    %v501 = vadd.f32 %v421, %v437
    %v502 = vadd.f32 %v422, %v438
    %v503 = vand.u32 2147483647, %v455
    %v504 = vand.u32 2147483647, %v456
    %v505 = vand.u32 2147483647, %v457
    %v506 = vand.u32 2147483647, %v458
    %v507 = vand.u32 2147483647, %v459
    %v508 = vand.u32 2147483647, %v460
    %v509 = vand.u32 2147483647, %v461
    %v510 = vand.u32 2147483647, %v462
    %v511 = vand.u32 2147483647, %v463
    %v512 = vand.u32 2147483647, %v464
    %v513 = vand.u32 2147483647, %v465
    %v514 = vand.u32 2147483647, %v466
    %v515 = vand.u32 2147483647, %v467
    %v516 = vand.u32 2147483647, %v468
    %v517 = vand.u32 2147483647, %v469
    %v518 = vand.u32 2147483647, %v470
    %v519 = vsub.f32 0.0, %v503
    %v520 = vsub.f32 0.0, %v504
    %v521 = vsub.f32 0.0, %v505
    %v522 = vsub.f32 0.0, %v506
    %v523 = vsub.f32 0.0, %v507
    %v524 = vsub.f32 0.0, %v508
    %v525 = vsub.f32 0.0, %v509
    %v526 = vsub.f32 0.0, %v510
    %v527 = vsub.f32 0.0, %v511
    %v528 = vsub.f32 0.0, %v512
    %v529 = vsub.f32 0.0, %v513
    %v530 = vsub.f32 0.0, %v514
    %v531 = vsub.f32 0.0, %v515
    %v532 = vsub.f32 0.0, %v516
    %v533 = vsub.f32 0.0, %v517
    %v534 = vsub.f32 0.0, %v518
    %v535 = vmul.f32 %v519, 1.442695
    %v536 = vpow.pop %v535
    %v537 = vmul.f32 %v520, 1.442695
    %v538 = vpow.pop %v537
    %v539 = vmul.f32 %v521, 1.442695
    %v540 = vpow.pop %v539
    %v541 = vmul.f32 %v522, 1.442695
    %v542 = vpow.pop %v541
    %v543 = vmul.f32 %v523, 1.442695
    %v544 = vpow.pop %v543
    %v545 = vmul.f32 %v524, 1.442695
    %v546 = vpow.pop %v545
    %v547 = vmul.f32 %v525, 1.442695
    %v548 = vpow.pop %v547
    %v549 = vmul.f32 %v526, 1.442695
    %v550 = vpow.pop %v549
    %v551 = vmul.f32 %v527, 1.442695
    %v552 = vpow.pop %v551
    %v553 = vmul.f32 %v528, 1.442695
    %v554 = vpow.pop %v553
    %v555 = vmul.f32 %v529, 1.442695
    %v556 = vpow.pop %v555
    %v557 = vmul.f32 %v530, 1.442695
    %v558 = vpow.pop %v557
    %v559 = vmul.f32 %v531, 1.442695
    %v560 = vpow.pop %v559
    %v561 = vmul.f32 %v532, 1.442695
    %v562 = vpow.pop %v561
    %v563 = vmul.f32 %v533, 1.442695
    %v564 = vpow.pop %v563
    %v565 = vmul.f32 %v534, 1.442695
    %v566 = vpow.pop %v565
    %v567 = vadd.f32 %v536, 1.0
    %v568 = vlog2.pop %v567
    %v569 = vmul.f32 %v568, 0.6931472
    %v570 = vmul.f32 -0.5, %v536
    %v571 = vadd.f32 %v570, 1.0
    %v572 = vmul.f32 %v571, %v536
    %v573 = vand.u32 2147483647, %v536
    %vm574 = vcmp.lt.f32.partialorder %v573, 0.0004427343
    %v575 = vsel %vm574, %v572, %v569
    %v576 = vadd.f32 %v538, 1.0
    %v577 = vlog2.pop %v576
    %v578 = vmul.f32 %v577, 0.6931472
    %v579 = vmul.f32 -0.5, %v538
    %v580 = vadd.f32 %v579, 1.0
    %v581 = vmul.f32 %v580, %v538
    %v582 = vand.u32 2147483647, %v538
    %vm583 = vcmp.lt.f32.partialorder %v582, 0.0004427343
    %v584 = vsel %vm583, %v581, %v578
    %v585 = vadd.f32 %v540, 1.0
    %v586 = vlog2.pop %v585
    %v587 = vmul.f32 %v586, 0.6931472
    %v588 = vmul.f32 -0.5, %v540
    %v589 = vadd.f32 %v588, 1.0
    %v590 = vmul.f32 %v589, %v540
    %v591 = vand.u32 2147483647, %v540
    %vm592 = vcmp.lt.f32.partialorder %v591, 0.0004427343
    %v593 = vsel %vm592, %v590, %v587
    %v594 = vadd.f32 %v542, 1.0
    %v595 = vlog2.pop %v594
    %v596 = vmul.f32 %v595, 0.6931472
    %v597 = vmul.f32 -0.5, %v542
    %v598 = vadd.f32 %v597, 1.0
    %v599 = vmul.f32 %v598, %v542
    %v600 = vand.u32 2147483647, %v542
    %vm601 = vcmp.lt.f32.partialorder %v600, 0.0004427343
    %v602 = vsel %vm601, %v599, %v596
    %v603 = vadd.f32 %v544, 1.0
    %v604 = vlog2.pop %v603
    %v605 = vmul.f32 %v604, 0.6931472
    %v606 = vmul.f32 -0.5, %v544
    %v607 = vadd.f32 %v606, 1.0
    %v608 = vmul.f32 %v607, %v544
    %v609 = vand.u32 2147483647, %v544
    %vm610 = vcmp.lt.f32.partialorder %v609, 0.0004427343
    %v611 = vsel %vm610, %v608, %v605
    %v612 = vadd.f32 %v546, 1.0
    %v613 = vlog2.pop %v612
    %v614 = vmul.f32 %v613, 0.6931472
    %v615 = vmul.f32 -0.5, %v546
    %v616 = vadd.f32 %v615, 1.0
    %v617 = vmul.f32 %v616, %v546
    %v618 = vand.u32 2147483647, %v546
    %vm619 = vcmp.lt.f32.partialorder %v618, 0.0004427343
    %v620 = vsel %vm619, %v617, %v614
    %v621 = vadd.f32 %v548, 1.0
    %v622 = vlog2.pop %v621
    %v623 = vmul.f32 %v622, 0.6931472
    %v624 = vmul.f32 -0.5, %v548
    %v625 = vadd.f32 %v624, 1.0
    %v626 = vmul.f32 %v625, %v548
    %v627 = vand.u32 2147483647, %v548
    %vm628 = vcmp.lt.f32.partialorder %v627, 0.0004427343
    %v629 = vsel %vm628, %v626, %v623
    %v630 = vadd.f32 %v550, 1.0
    %v631 = vlog2.pop %v630
    %v632 = vmul.f32 %v631, 0.6931472
    %v633 = vmul.f32 -0.5, %v550
    %v634 = vadd.f32 %v633, 1.0
    %v635 = vmul.f32 %v634, %v550
    %v636 = vand.u32 2147483647, %v550
    %vm637 = vcmp.lt.f32.partialorder %v636, 0.0004427343
    %v638 = vsel %vm637, %v635, %v632
    %v639 = vadd.f32 %v552, 1.0
    %v640 = vlog2.pop %v639
    %v641 = vmul.f32 %v640, 0.6931472
    %v642 = vmul.f32 -0.5, %v552
    %v643 = vadd.f32 %v642, 1.0
    %v644 = vmul.f32 %v643, %v552
    %v645 = vand.u32 2147483647, %v552
    %vm646 = vcmp.lt.f32.partialorder %v645, 0.0004427343
    %v647 = vsel %vm646, %v644, %v641
    %v648 = vadd.f32 %v554, 1.0
    %v649 = vlog2.pop %v648
    %v650 = vmul.f32 %v649, 0.6931472
    %v651 = vmul.f32 -0.5, %v554
    %v652 = vadd.f32 %v651, 1.0
    %v653 = vmul.f32 %v652, %v554
    %v654 = vand.u32 2147483647, %v554
    %vm655 = vcmp.lt.f32.partialorder %v654, 0.0004427343
    %v656 = vsel %vm655, %v653, %v650
    %v657 = vadd.f32 %v556, 1.0
    %v658 = vlog2.pop %v657
    %v659 = vmul.f32 %v658, 0.6931472
    %v660 = vmul.f32 -0.5, %v556
    %v661 = vadd.f32 %v660, 1.0
    %v662 = vmul.f32 %v661, %v556
    %v663 = vand.u32 2147483647, %v556
    %vm664 = vcmp.lt.f32.partialorder %v663, 0.0004427343
    %v665 = vsel %vm664, %v662, %v659
    %v666 = vadd.f32 %v558, 1.0
    %v667 = vlog2.pop %v666
    %v668 = vmul.f32 %v667, 0.6931472
    %v669 = vmul.f32 -0.5, %v558
    %v670 = vadd.f32 %v669, 1.0
    %v671 = vmul.f32 %v670, %v558
    %v672 = vand.u32 2147483647, %v558
    %vm673 = vcmp.lt.f32.partialorder %v672, 0.0004427343
    %v674 = vsel %vm673, %v671, %v668
    %v675 = vadd.f32 %v560, 1.0
    %v676 = vlog2.pop %v675
    %v677 = vmul.f32 %v676, 0.6931472
    %v678 = vmul.f32 -0.5, %v560
    %v679 = vadd.f32 %v678, 1.0
    %v680 = vmul.f32 %v679, %v560
    %v681 = vand.u32 2147483647, %v560
    %vm682 = vcmp.lt.f32.partialorder %v681, 0.0004427343
    %v683 = vsel %vm682, %v680, %v677
    %v684 = vadd.f32 %v562, 1.0
    %v685 = vlog2.pop %v684
    %v686 = vmul.f32 %v685, 0.6931472
    %v687 = vmul.f32 -0.5, %v562
    %v688 = vadd.f32 %v687, 1.0
    %v689 = vmul.f32 %v688, %v562
    %v690 = vand.u32 2147483647, %v562
    %vm691 = vcmp.lt.f32.partialorder %v690, 0.0004427343
    %v692 = vsel %vm691, %v689, %v686
    %v693 = vadd.f32 %v564, 1.0
    %v694 = vlog2.pop %v693
    %v695 = vmul.f32 %v694, 0.6931472
    %v696 = vmul.f32 -0.5, %v564
    %v697 = vadd.f32 %v696, 1.0
    %v698 = vmul.f32 %v697, %v564
    %v699 = vand.u32 2147483647, %v564
    %vm700 = vcmp.lt.f32.partialorder %v699, 0.0004427343
    %v701 = vsel %vm700, %v698, %v695
    %v702 = vadd.f32 %v566, 1.0
    %v703 = vlog2.pop %v702
    %v704 = vmul.f32 %v703, 0.6931472
    %v705 = vmul.f32 -0.5, %v566
    %v706 = vadd.f32 %v705, 1.0
    %v707 = vmul.f32 %v706, %v566
    %v708 = vand.u32 2147483647, %v566
    %vm709 = vcmp.lt.f32.partialorder %v708, 0.0004427343
    %v710 = vsel %vm709, %v707, %v704
    %v711 = vadd.f32 %v439, %v575
    %v712 = vadd.f32 %v440, %v584
    %v713 = vadd.f32 %v441, %v593
    %v714 = vadd.f32 %v442, %v602
    %v715 = vadd.f32 %v443, %v611
    %v716 = vadd.f32 %v444, %v620
    %v717 = vadd.f32 %v445, %v629
    %v718 = vadd.f32 %v446, %v638
    %v719 = vadd.f32 %v447, %v647
    %v720 = vadd.f32 %v448, %v656
    %v721 = vadd.f32 %v449, %v665
    %v722 = vadd.f32 %v450, %v674
    %v723 = vadd.f32 %v451, %v683
    %v724 = vadd.f32 %v452, %v692
    %v725 = vadd.f32 %v453, %v701
    %v726 = vadd.f32 %v454, %v710
    %v727 = vsel %vm471, %v487, %v711
    %v728 = vsel %vm472, %v488, %v712
    %v729 = vsel %vm473, %v489, %v713
    %v730 = vsel %vm474, %v490, %v714
    %v731 = vsel %vm475, %v491, %v715
    %v732 = vsel %vm476, %v492, %v716
    %v733 = vsel %vm477, %v493, %v717
    %v734 = vsel %vm478, %v494, %v718
    %v735 = vsel %vm479, %v495, %v719
    %v736 = vsel %vm480, %v496, %v720
    %v737 = vsel %vm481, %v497, %v721
    %v738 = vsel %vm482, %v498, %v722
    %v739 = vsel %vm483, %v499, %v723
    %v740 = vsel %vm484, %v500, %v724
    %v741 = vsel %vm485, %v501, %v725
    %v742 = vsel %vm486, %v502, %v726
    %v743 = vsub.f32 %v311, %v727
    %v744 = vsub.f32 %v312, %v728
    %v745 = vsub.f32 %v313, %v729
    %v746 = vsub.f32 %v314, %v730
    %v747 = vsub.f32 %v315, %v731
    %v748 = vsub.f32 %v316, %v732
    %v749 = vsub.f32 %v317, %v733
    %v750 = vsub.f32 %v318, %v734
    %v751 = vsub.f32 %v319, %v735
    %v752 = vsub.f32 %v320, %v736
    %v753 = vsub.f32 %v321, %v737
    %v754 = vsub.f32 %v322, %v738
    %v755 = vsub.f32 %v323, %v739
    %v756 = vsub.f32 %v324, %v740
    %v757 = vsub.f32 %v325, %v741
    %v758 = vsub.f32 %v326, %v742
    %v759 = vmul.f32 %v247, %v743
    %v760 = vmul.f32 %v248, %v744
    %v761 = vmul.f32 %v249, %v745
    %v762 = vmul.f32 %v250, %v746
    %v763 = vmul.f32 %v251, %v747
    %v764 = vmul.f32 %v252, %v748
    %v765 = vmul.f32 %v253, %v749
    %v766 = vmul.f32 %v254, %v750
    %v767 = vmul.f32 %v255, %v751
    %v768 = vmul.f32 %v256, %v752
    %v769 = vmul.f32 %v257, %v753
    %v770 = vmul.f32 %v258, %v754
    %v771 = vmul.f32 %v259, %v755
    %v772 = vmul.f32 %v260, %v756
    %v773 = vmul.f32 %v261, %v757
    %v774 = vmul.f32 %v262, %v758
    %v775 = vadd.f32 %v759, %v760
    %v776 = vadd.f32 %v775, %v761
    %v777 = vadd.f32 %v776, %v762
    %v778 = vadd.f32 %v777, %v763
    %v779 = vadd.f32 %v778, %v764
    %v780 = vadd.f32 %v779, %v765
    %v781 = vadd.f32 %v780, %v766
    %v782 = vadd.f32 %v781, %v767
    %v783 = vadd.f32 %v782, %v768
    %v784 = vadd.f32 %v783, %v769
    %v785 = vadd.f32 %v784, %v770
    %v786 = vadd.f32 %v785, %v771
    %v787 = vadd.f32 %v786, %v772
    %v788 = vadd.f32 %v787, %v773
    %v789 = vadd.f32 %v788, %v774
    %790 = vadd.xlane.f32.xlu0 %v789
    %v791 = vpop.xlane.xlu0 %790
    %v792 = vrot.slane %v791, 4
    %v793 = vadd.f32 %v791, %v792
    %v794 = vrot.slane %v793, 2
    %v795 = vadd.f32 %v793, %v794
    %v796 = vrot.slane %v795, 1
    %v797 = vadd.f32 %v795, %v796
    %s798 = vtos %v797
    %p799 = scmp.eq.s32.totalorder 0, 0
    // Predicated region
    $region14: #{bayesian_conv2d_forward.2} parent=1 // pred_check
      %p800 = pneg %p799
    $region15: #{bayesian_conv2d_forward.2} parent=1 // pred_check_branch
      %802 = sbr.rel (%p800) target = $region17
    $region16: #{bayesian_conv2d_forward.2} parent=1 // pred_region
      %s803 = scalar_lea.smem [#allocation2], 0
      %804 = sst [smem:[%s803]] 0.0
    $region17: #{bayesian_conv2d_forward.2} parent=1 // pred_fallthru
      _
    %s805 = sld [smem:[#allocation2]]
    %s806 = sadd.f32 %s805, %s798
    %s807 = scalar_lea.smem [#allocation2], 0
    %808 = sst [smem:[%s807]] %s806
    // Predicated region
    $region18: #{bayesian_conv2d_forward.2} parent=1 // pred_check
      %p809 = pneg %p799
    $region19: #{bayesian_conv2d_forward.2} parent=1 // pred_check_branch
      %811 = sbr.rel (%p809) target = $region21
    $region20: #{bayesian_conv2d_forward.2} parent=1 // pred_region
      %s812 = sld [smem:[#allocation2]]
      %s813 = scalar_lea.smem [#allocation3], 0
      %814 = sst [smem:[%s813]] %s812
    $region21: #{bayesian_conv2d_forward.2} parent=1 // pred_fallthru
      _
    // Predicated region
    $region22: #{bayesian_conv2d_forward.2} parent=1 // pred_check
      _
    $region23: #{bayesian_conv2d_forward.2} parent=1 // pred_check_branch
      %816 = sbr.rel (0) target = $region25
    $region24: #{bayesian_conv2d_forward.2} parent=1 // pred_region
      _
    $region25: #{bayesian_conv2d_forward.2} parent=1 // pred_fallthru
      _
    // Predicated region
    $region26: #{bayesian_conv2d_forward.2} parent=1 // pred_check
      _
    $region27: #{bayesian_conv2d_forward.2} parent=1 // pred_check_branch
      %818 = sbr.rel (0) target = $region29
    $region28: #{bayesian_conv2d_forward.2} parent=1 // pred_region
      %820 = vsyncadd [#allocation4], 0
      %s822 = sshll.u32 %s4, 4
      %s823 = int_to_ptr.hbm [resolvable:$true] %s822
      %825 = dma.smem_to_hbm [#allocation3], 16, %s823, [#allocation4]
    $region29: #{bayesian_conv2d_forward.2} parent=1 // pred_fallthru
      _
    // Predicated region
    $region30: #{bayesian_conv2d_forward.2} parent=1 // pred_check
      _
    $region31: #{bayesian_conv2d_forward.2} parent=1 // pred_check_branch
      %827 = sbr.rel (0) target = $region33
    $region32: #{bayesian_conv2d_forward.2} parent=1 // pred_region
      _
    $region33: #{bayesian_conv2d_forward.2} parent=1 // pred_fallthru
      _
    // Predicated region
    $region34: #{bayesian_conv2d_forward.2} parent=1 // pred_check
      _
    $region35: #{bayesian_conv2d_forward.2} parent=1 // pred_check_branch
      %829 = sbr.rel (0) target = $region37
    $region36: #{bayesian_conv2d_forward.2} parent=1 // pred_region
      %831 = dma.done [#allocation4], 16
    $region37: #{bayesian_conv2d_forward.2} parent=1 // pred_fallthru
      _
    %832 = sfence
    %833 = vsyncpa [#allocation4], 1

// kernel: bayesian_conv2d_forward.3
$region0: #{bayesian_conv2d_forward.3}
  #allocation0 [shape = 'u32[]', space=smem, size = 0x4, offset = 0x4, fixed_abs, tag = 'smem constant byte address 0x4 - core index']
  #allocation1 [shape = 'u32[72,128]{1,0:T(1,128)}', space=vmem, size = 0x9000, scoped, tag = 'internal scratch']
  %s0 = inlined_call_operand.vmem [shape: bf16[512,128], index: 0, kind: input, shape index: {}]
  %s1 = inlined_call_operand.vmem [shape: bf16[128,128], index: 1, kind: input, shape index: {}]
  %s2 = inlined_call_operand.vmem [shape: bf16[512,128], index: 2, kind: output, shape index: {}]
  %s3 = sld [smem:[#allocation0]]
  $region18: #{bayesian_conv2d_forward.3} parent=0
    _
  %s5 = ssub.s32 1, %s3
  %s6 = scalar_select 0, %s5, %s3
  // Predicated region
  $region2: #{bayesian_conv2d_forward.3} parent=0 // pred_check
    _
  $region3: #{bayesian_conv2d_forward.3} parent=0 // pred_check_branch
    %8 = sbr.rel (0) target = $region5
  $region4: #{bayesian_conv2d_forward.3} parent=0 // pred_region
    _
  $region5: #{bayesian_conv2d_forward.3} parent=0 // pred_fallthru
    _
  // Predicated region
  $region6: #{bayesian_conv2d_forward.3} parent=0 // pred_check
    _
  $region7: #{bayesian_conv2d_forward.3} parent=0 // pred_check_branch
    %10 = sbr.rel (0) target = $region9
  $region8: #{bayesian_conv2d_forward.3} parent=0 // pred_region
    _
  $region9: #{bayesian_conv2d_forward.3} parent=0 // pred_fallthru
    _
  %v11 = vld [vmem:[%s0] sm:$0xf]
  %v12 = vld [vmem:[%s0 + $0x4] sm:$0xf]
  %v13 = vld [vmem:[%s0 + $0x8] sm:$0xf]
  %v14 = vld [vmem:[%s0 + $0xc] sm:$0xf]
  %v15 = vld [vmem:[%s0 + $0x10] sm:$0xf]
  %v16 = vld [vmem:[%s0 + $0x14] sm:$0xf]
  %v17 = vld [vmem:[%s0 + $0x18] sm:$0xf]
  %v18 = vld [vmem:[%s0 + $0x1c] sm:$0xf]
  %v19 = vld [vmem:[%s0 + $0x20] sm:$0xf]
  %v20 = vld [vmem:[%s0 + $0x24] sm:$0xf]
  %v21 = vld [vmem:[%s0 + $0x28] sm:$0xf]
  %v22 = vld [vmem:[%s0 + $0x2c] sm:$0xf]
  %v23 = vld [vmem:[%s0 + $0x30] sm:$0xf]
  %v24 = vld [vmem:[%s0 + $0x34] sm:$0xf]
  %v25 = vld [vmem:[%s0 + $0x38] sm:$0xf]
  %v26 = vld [vmem:[%s0 + $0x3c] sm:$0xf]
  %v27 = vld [vmem:[%s0 + $0x40] sm:$0xf]
  %v28 = vld [vmem:[%s0 + $0x44] sm:$0xf]
  %v29 = vld [vmem:[%s0 + $0x48] sm:$0xf]
  %v30 = vld [vmem:[%s0 + $0x4c] sm:$0xf]
  %v31 = vld [vmem:[%s0 + $0x50] sm:$0xf]
  %v32 = vld [vmem:[%s0 + $0x54] sm:$0xf]
  %v33 = vld [vmem:[%s0 + $0x58] sm:$0xf]
  %v34 = vld [vmem:[%s0 + $0x5c] sm:$0xf]
  %v35 = vld [vmem:[%s0 + $0x60] sm:$0xf]
  %v36 = vld [vmem:[%s0 + $0x64] sm:$0xf]
  %v37 = vld [vmem:[%s0 + $0x68] sm:$0xf]
  %v38 = vld [vmem:[%s0 + $0x6c] sm:$0xf]
  %v39 = vld [vmem:[%s0 + $0x70] sm:$0xf]
  %v40 = vld [vmem:[%s0 + $0x74] sm:$0xf]
  %v41 = vld [vmem:[%s0 + $0x78] sm:$0xf]
  %v42 = vld [vmem:[%s0 + $0x7c] sm:$0xf]
  %v43 = vld [vmem:[%s0 + $0x80] sm:$0xf]
  %v44 = vld [vmem:[%s0 + $0x84] sm:$0xf]
  %v45 = vld [vmem:[%s0 + $0x88] sm:$0xf]
  %v46 = vld [vmem:[%s0 + $0x8c] sm:$0xf]
  %v47 = vld [vmem:[%s0 + $0x90] sm:$0xf]
  %v48 = vld [vmem:[%s0 + $0x94] sm:$0xf]
  %v49 = vld [vmem:[%s0 + $0x98] sm:$0xf]
  %v50 = vld [vmem:[%s0 + $0x9c] sm:$0xf]
  %v51 = vld [vmem:[%s0 + $0xa0] sm:$0xf]
  %v52 = vld [vmem:[%s0 + $0xa4] sm:$0xf]
  %v53 = vld [vmem:[%s0 + $0xa8] sm:$0xf]
  %v54 = vld [vmem:[%s0 + $0xac] sm:$0xf]
  %v55 = vld [vmem:[%s0 + $0xb0] sm:$0xf]
  %v56 = vld [vmem:[%s0 + $0xb4] sm:$0xf]
  %v57 = vld [vmem:[%s0 + $0xb8] sm:$0xf]
  %v58 = vld [vmem:[%s0 + $0xbc] sm:$0xf]
  %v59 = vld [vmem:[%s0 + $0xc0] sm:$0xf]
  %v60 = vld [vmem:[%s0 + $0xc4] sm:$0xf]
  %v61 = vld [vmem:[%s0 + $0xc8] sm:$0xf]
  %v62 = vld [vmem:[%s0 + $0xcc] sm:$0xf]
  %v63 = vld [vmem:[%s0 + $0xd0] sm:$0xf]
  %v64 = vld [vmem:[%s0 + $0xd4] sm:$0xf]
  %v65 = vld [vmem:[%s0 + $0xd8] sm:$0xf]
  %v66 = vld [vmem:[%s0 + $0xdc] sm:$0xf]
  %v67 = vld [vmem:[%s0 + $0xe0] sm:$0xf]
  %v68 = vld [vmem:[%s0 + $0xe4] sm:$0xf]
  %v69 = vld [vmem:[%s0 + $0xe8] sm:$0xf]
  %v70 = vld [vmem:[%s0 + $0xec] sm:$0xf]
  %v71 = vld [vmem:[%s0 + $0xf0] sm:$0xf]
  %v72 = vld [vmem:[%s0 + $0xf4] sm:$0xf]
  %v73 = vld [vmem:[%s0 + $0xf8] sm:$0xf]
  %v74 = vld [vmem:[%s0 + $0xfc] sm:$0xf]
  %v75 = vld [vmem:[%s1] sm:$0xf]
  %v76 = vld [vmem:[%s1 + $0x4] sm:$0xf]
  %v77 = vld [vmem:[%s1 + $0x8] sm:$0xf]
  %v78 = vld [vmem:[%s1 + $0xc] sm:$0xf]
  %v79 = vld [vmem:[%s1 + $0x10] sm:$0xf]
  %v80 = vld [vmem:[%s1 + $0x14] sm:$0xf]
  %v81 = vld [vmem:[%s1 + $0x18] sm:$0xf]
  %v82 = vld [vmem:[%s1 + $0x1c] sm:$0xf]
  %v83 = vld [vmem:[%s1 + $0x20] sm:$0xf]
  %v84 = vld [vmem:[%s1 + $0x24] sm:$0xf]
  %v85 = vld [vmem:[%s1 + $0x28] sm:$0xf]
  %v86 = vld [vmem:[%s1 + $0x2c] sm:$0xf]
  %v87 = vld [vmem:[%s1 + $0x30] sm:$0xf]
  %v88 = vld [vmem:[%s1 + $0x34] sm:$0xf]
  %v89 = vld [vmem:[%s1 + $0x38] sm:$0xf]
  %v90 = vld [vmem:[%s1 + $0x3c] sm:$0xf]
  %v155 = vunpack.c.l.b16 %v11
  %v156 = vunpack.c.l.b16 %v12
  %v157 = vunpack.c.l.b16 %v13
  %v158 = vunpack.c.l.b16 %v14
  %v159 = vunpack.c.l.b16 %v15
  %v160 = vunpack.c.l.b16 %v16
  %v161 = vunpack.c.l.b16 %v17
  %v162 = vunpack.c.l.b16 %v18
  %v163 = vunpack.c.l.b16 %v19
  %v164 = vunpack.c.l.b16 %v20
  %v165 = vunpack.c.l.b16 %v21
  %v166 = vunpack.c.l.b16 %v22
  %v167 = vunpack.c.l.b16 %v23
  %v168 = vunpack.c.l.b16 %v24
  %v169 = vunpack.c.l.b16 %v25
  %v170 = vunpack.c.l.b16 %v26
  %v171 = vunpack.c.l.b16 %v27
  %v172 = vunpack.c.l.b16 %v28
  %v173 = vunpack.c.l.b16 %v29
  %v174 = vunpack.c.l.b16 %v30
  %v175 = vunpack.c.l.b16 %v31
  %v176 = vunpack.c.l.b16 %v32
  %v177 = vunpack.c.l.b16 %v33
  %v178 = vunpack.c.l.b16 %v34
  %v179 = vunpack.c.l.b16 %v35
  %v180 = vunpack.c.l.b16 %v36
  %v181 = vunpack.c.l.b16 %v37
  %v182 = vunpack.c.l.b16 %v38
  %v183 = vunpack.c.l.b16 %v39
  %v184 = vunpack.c.l.b16 %v40
  %v185 = vunpack.c.l.b16 %v41
  %v186 = vunpack.c.l.b16 %v42
  %v187 = vunpack.c.l.b16 %v43
  %v188 = vunpack.c.l.b16 %v44
  %v189 = vunpack.c.l.b16 %v45
  %v190 = vunpack.c.l.b16 %v46
  %v191 = vunpack.c.l.b16 %v47
  %v192 = vunpack.c.l.b16 %v48
  %v193 = vunpack.c.l.b16 %v49
  %v194 = vunpack.c.l.b16 %v50
  %v195 = vunpack.c.l.b16 %v51
  %v196 = vunpack.c.l.b16 %v52
  %v197 = vunpack.c.l.b16 %v53
  %v198 = vunpack.c.l.b16 %v54
  %v199 = vunpack.c.l.b16 %v55
  %v200 = vunpack.c.l.b16 %v56
  %v201 = vunpack.c.l.b16 %v57
  %v202 = vunpack.c.l.b16 %v58
  %v203 = vunpack.c.l.b16 %v59
  %v204 = vunpack.c.l.b16 %v60
  %v205 = vunpack.c.l.b16 %v61
  %v206 = vunpack.c.l.b16 %v62
  %v207 = vunpack.c.l.b16 %v63
  %v208 = vunpack.c.l.b16 %v64
  %v209 = vunpack.c.l.b16 %v65
  %v210 = vunpack.c.l.b16 %v66
  %v211 = vunpack.c.l.b16 %v67
  %v212 = vunpack.c.l.b16 %v68
  %v213 = vunpack.c.l.b16 %v69
  %v214 = vunpack.c.l.b16 %v70
  %v215 = vunpack.c.l.b16 %v71
  %v216 = vunpack.c.l.b16 %v72
  %v217 = vunpack.c.l.b16 %v73
  %v218 = vunpack.c.l.b16 %v74
  %v219 = vpack.c.b16 %v156, %v155
  %v220 = vpack.c.b16 %v158, %v157
  %v221 = vpack.c.b16 %v160, %v159
  %v222 = vpack.c.b16 %v162, %v161
  %v223 = vpack.c.b16 %v164, %v163
  %v224 = vpack.c.b16 %v166, %v165
  %v225 = vpack.c.b16 %v168, %v167
  %v226 = vpack.c.b16 %v170, %v169
  %v227 = vpack.c.b16 %v172, %v171
  %v228 = vpack.c.b16 %v174, %v173
  %v229 = vpack.c.b16 %v176, %v175
  %v230 = vpack.c.b16 %v178, %v177
  %v231 = vpack.c.b16 %v180, %v179
  %v232 = vpack.c.b16 %v182, %v181
  %v233 = vpack.c.b16 %v184, %v183
  %v234 = vpack.c.b16 %v186, %v185
  %v235 = vpack.c.b16 %v188, %v187
  %v236 = vpack.c.b16 %v190, %v189
  %v237 = vpack.c.b16 %v192, %v191
  %v238 = vpack.c.b16 %v194, %v193
  %v239 = vpack.c.b16 %v196, %v195
  %v240 = vpack.c.b16 %v198, %v197
  %v241 = vpack.c.b16 %v200, %v199
  %v242 = vpack.c.b16 %v202, %v201
  %v243 = vpack.c.b16 %v204, %v203
  %v244 = vpack.c.b16 %v206, %v205
  %v245 = vpack.c.b16 %v208, %v207
  %v246 = vpack.c.b16 %v210, %v209
  %v247 = vpack.c.b16 %v212, %v211
  %v248 = vpack.c.b16 %v214, %v213
  %v249 = vpack.c.b16 %v216, %v215
  %v250 = vpack.c.b16 %v218, %v217
  %v299 = vunpack.c.l.b16 %v75
  %v300 = vunpack.c.l.b16 %v76
  %v301 = vunpack.c.l.b16 %v77
  %v302 = vunpack.c.l.b16 %v78
  %v303 = vunpack.c.l.b16 %v79
  %v304 = vunpack.c.l.b16 %v80
  %v305 = vunpack.c.l.b16 %v81
  %v306 = vunpack.c.l.b16 %v82
  %v307 = vunpack.c.l.b16 %v83
  %v308 = vunpack.c.l.b16 %v84
  %v309 = vunpack.c.l.b16 %v85
  %v310 = vunpack.c.l.b16 %v86
  %v311 = vunpack.c.l.b16 %v87
  %v312 = vunpack.c.l.b16 %v88
  %v313 = vunpack.c.l.b16 %v89
  %v314 = vunpack.c.l.b16 %v90
  %v315 = vpack.c.b16 %v300, %v299
  %v316 = vpack.c.b16 %v302, %v301
  %v317 = vpack.c.b16 %v304, %v303
  %v318 = vpack.c.b16 %v306, %v305
  %v319 = vpack.c.b16 %v308, %v307
  %v320 = vpack.c.b16 %v310, %v309
  %v321 = vpack.c.b16 %v312, %v311
  %v322 = vpack.c.b16 %v314, %v313
  %331 = vmatpush.bf16.msra.mxu0 %v322
  %332 = vmatpush.bf16.msra.mxu0 %v321
  %333 = vmatpush.bf16.msra.mxu0 %v320
  %334 = vmatpush.bf16.msra.mxu0 %v319
  %335 = vmatpush.bf16.msra.mxu0 %v318
  %336 = vmatpush.bf16.msra.mxu0 %v317
  %337 = vmatpush.bf16.msra.mxu0 %v316
  %338 = vmatpush.bf16.msra.mxu0 %v315
  %339 = vmatmul.bf16.gmra.mxu0 %v219
  %v340 = vpop.f32.mrf.mxu0
  %v341 = vadd.f32 0.0, %v340
  %v342 = vpop.f32.mrf.mxu0
  %v343 = vadd.f32 0.0, %v342
  %344 = vmatmul.bf16.gmra.mxu0 %v220
  %v345 = vpop.f32.mrf.mxu0
  %v346 = vadd.f32 0.0, %v345
  %v347 = vpop.f32.mrf.mxu0
  %v348 = vadd.f32 0.0, %v347
  %349 = vmatmul.bf16.gmra.mxu0 %v221
  %v350 = vpop.f32.mrf.mxu0
  %v351 = vadd.f32 0.0, %v350
  %v352 = vpop.f32.mrf.mxu0
  %v353 = vadd.f32 0.0, %v352
  %354 = vmatmul.bf16.gmra.mxu0 %v222
  %v355 = vpop.f32.mrf.mxu0
  %v356 = vadd.f32 0.0, %v355
  %v357 = vpop.f32.mrf.mxu0
  %v358 = vadd.f32 0.0, %v357
  %359 = vmatmul.bf16.gmra.mxu0 %v223
  %v360 = vpop.f32.mrf.mxu0
  %v361 = vadd.f32 0.0, %v360
  %v362 = vpop.f32.mrf.mxu0
  %v363 = vadd.f32 0.0, %v362
  %364 = vmatmul.bf16.gmra.mxu0 %v224
  %v365 = vpop.f32.mrf.mxu0
  %v366 = vadd.f32 0.0, %v365
  %v367 = vpop.f32.mrf.mxu0
  %v368 = vadd.f32 0.0, %v367
  %369 = vmatmul.bf16.gmra.mxu0 %v225
  %v370 = vpop.f32.mrf.mxu0
  %v371 = vadd.f32 0.0, %v370
  %v372 = vpop.f32.mrf.mxu0
  %v373 = vadd.f32 0.0, %v372
  %374 = vmatmul.bf16.gmra.mxu0 %v226
  %v375 = vpop.f32.mrf.mxu0
  %v376 = vadd.f32 0.0, %v375
  %v377 = vpop.f32.mrf.mxu0
  %v378 = vadd.f32 0.0, %v377
  %379 = vmatmul.bf16.gmra.mxu0 %v227
  %v380 = vpop.f32.mrf.mxu0
  %v381 = vadd.f32 0.0, %v380
  %v382 = vpop.f32.mrf.mxu0
  %v383 = vadd.f32 0.0, %v382
  %384 = vmatmul.bf16.gmra.mxu0 %v228
  %v385 = vpop.f32.mrf.mxu0
  %v386 = vadd.f32 0.0, %v385
  %v387 = vpop.f32.mrf.mxu0
  %v388 = vadd.f32 0.0, %v387
  %389 = vmatmul.bf16.gmra.mxu0 %v229
  %v390 = vpop.f32.mrf.mxu0
  %v391 = vadd.f32 0.0, %v390
  %v392 = vpop.f32.mrf.mxu0
  %v393 = vadd.f32 0.0, %v392
  %394 = vmatmul.bf16.gmra.mxu0 %v230
  %v395 = vpop.f32.mrf.mxu0
  %v396 = vadd.f32 0.0, %v395
  %v397 = vpop.f32.mrf.mxu0
  %v398 = vadd.f32 0.0, %v397
  %399 = vmatmul.bf16.gmra.mxu0 %v231
  %v400 = vpop.f32.mrf.mxu0
  %v401 = vadd.f32 0.0, %v400
  %v402 = vpop.f32.mrf.mxu0
  %v403 = vadd.f32 0.0, %v402
  %404 = vmatmul.bf16.gmra.mxu0 %v232
  %v405 = vpop.f32.mrf.mxu0
  %v406 = vadd.f32 0.0, %v405
  %v407 = vpop.f32.mrf.mxu0
  %v408 = vadd.f32 0.0, %v407
  %409 = vmatmul.bf16.gmra.mxu0 %v233
  %v410 = vpop.f32.mrf.mxu0
  %v411 = vadd.f32 0.0, %v410
  %v412 = vpop.f32.mrf.mxu0
  %v413 = vadd.f32 0.0, %v412
  %414 = vmatmul.bf16.gmra.mxu0 %v234
  %v415 = vpop.f32.mrf.mxu0
  %v416 = vadd.f32 0.0, %v415
  %v417 = vpop.f32.mrf.mxu0
  %v418 = vadd.f32 0.0, %v417
  %419 = vmatmul.bf16.gmra.mxu0 %v235
  %v420 = vpop.f32.mrf.mxu0
  %v421 = vadd.f32 0.0, %v420
  %v422 = vpop.f32.mrf.mxu0
  %v423 = vadd.f32 0.0, %v422
  %424 = vmatmul.bf16.gmra.mxu0 %v236
  %v425 = vpop.f32.mrf.mxu0
  %v426 = vadd.f32 0.0, %v425
  %v427 = vpop.f32.mrf.mxu0
  %v428 = vadd.f32 0.0, %v427
  %429 = vmatmul.bf16.gmra.mxu0 %v237
  %v430 = vpop.f32.mrf.mxu0
  %v431 = vadd.f32 0.0, %v430
  %v432 = vpop.f32.mrf.mxu0
  %v433 = vadd.f32 0.0, %v432
  %434 = vmatmul.bf16.gmra.mxu0 %v238
  %v435 = vpop.f32.mrf.mxu0
  %v436 = vadd.f32 0.0, %v435
  %v437 = vpop.f32.mrf.mxu0
  %v438 = vadd.f32 0.0, %v437
  %439 = vmatmul.bf16.gmra.mxu0 %v239
  %v440 = vpop.f32.mrf.mxu0
  %v441 = vadd.f32 0.0, %v440
  %v442 = vpop.f32.mrf.mxu0
  %v443 = vadd.f32 0.0, %v442
  %444 = vmatmul.bf16.gmra.mxu0 %v240
  %v445 = vpop.f32.mrf.mxu0
  %v446 = vadd.f32 0.0, %v445
  %v447 = vpop.f32.mrf.mxu0
  %v448 = vadd.f32 0.0, %v447
  %449 = vmatmul.bf16.gmra.mxu0 %v241
  %v450 = vpop.f32.mrf.mxu0
  %v451 = vadd.f32 0.0, %v450
  %v452 = vpop.f32.mrf.mxu0
  %v453 = vadd.f32 0.0, %v452
  %454 = vmatmul.bf16.gmra.mxu0 %v242
  %v455 = vpop.f32.mrf.mxu0
  %v456 = vadd.f32 0.0, %v455
  %v457 = vpop.f32.mrf.mxu0
  %v458 = vadd.f32 0.0, %v457
  %459 = vmatmul.bf16.gmra.mxu0 %v243
  %v460 = vpop.f32.mrf.mxu0
  %v461 = vadd.f32 0.0, %v460
  %v462 = vpop.f32.mrf.mxu0
  %v463 = vadd.f32 0.0, %v462
  %464 = vmatmul.bf16.gmra.mxu0 %v244
  %v465 = vpop.f32.mrf.mxu0
  %v466 = vadd.f32 0.0, %v465
  %v467 = vpop.f32.mrf.mxu0
  %v468 = vadd.f32 0.0, %v467
  %469 = vmatmul.bf16.gmra.mxu0 %v245
  %v470 = vpop.f32.mrf.mxu0
  %v471 = vadd.f32 0.0, %v470
  %v472 = vpop.f32.mrf.mxu0
  %v473 = vadd.f32 0.0, %v472
  %474 = vmatmul.bf16.gmra.mxu0 %v246
  %v475 = vpop.f32.mrf.mxu0
  %v476 = vadd.f32 0.0, %v475
  %v477 = vpop.f32.mrf.mxu0
  %v478 = vadd.f32 0.0, %v477
  %479 = vmatmul.bf16.gmra.mxu0 %v247
  %v480 = vpop.f32.mrf.mxu0
  %v481 = vadd.f32 0.0, %v480
  %v482 = vpop.f32.mrf.mxu0
  %v483 = vadd.f32 0.0, %v482
  %484 = vmatmul.bf16.gmra.mxu0 %v248
  %v485 = vpop.f32.mrf.mxu0
  %v486 = vadd.f32 0.0, %v485
  %v487 = vpop.f32.mrf.mxu0
  %v488 = vadd.f32 0.0, %v487
  %489 = vmatmul.bf16.gmra.mxu0 %v249
  %v490 = vpop.f32.mrf.mxu0
  %v491 = vadd.f32 0.0, %v490
  %v492 = vpop.f32.mrf.mxu0
  %v493 = vadd.f32 0.0, %v492
  %494 = vmatmul.bf16.gmra.mxu0 %v250
  %v495 = vpop.f32.mrf.mxu0
  %v496 = vadd.f32 0.0, %v495
  %v497 = vpop.f32.mrf.mxu0
  %v498 = vadd.f32 0.0, %v497
  %499 = vdwg.mxu0
  %v500 = vpack.c.bf16 %v341, %v341
  %v501 = vpack.c.bf16 %v343, %v343
  %v502 = vpack.c.bf16 %v346, %v346
  %v503 = vpack.c.bf16 %v348, %v348
  %v504 = vpack.c.bf16 %v351, %v351
  %v505 = vpack.c.bf16 %v353, %v353
  %v506 = vpack.c.bf16 %v356, %v356
  %v507 = vpack.c.bf16 %v358, %v358
  %v508 = vpack.c.bf16 %v361, %v361
  %v509 = vpack.c.bf16 %v363, %v363
  %v510 = vpack.c.bf16 %v366, %v366
  %v511 = vpack.c.bf16 %v368, %v368
  %v512 = vpack.c.bf16 %v371, %v371
  %v513 = vpack.c.bf16 %v373, %v373
  %v514 = vpack.c.bf16 %v376, %v376
  %v515 = vpack.c.bf16 %v378, %v378
  %v516 = vpack.c.bf16 %v381, %v381
  %v517 = vpack.c.bf16 %v383, %v383
  %v518 = vpack.c.bf16 %v386, %v386
  %v519 = vpack.c.bf16 %v388, %v388
  %v520 = vpack.c.bf16 %v391, %v391
  %v521 = vpack.c.bf16 %v393, %v393
  %v522 = vpack.c.bf16 %v396, %v396
  %v523 = vpack.c.bf16 %v398, %v398
  %v524 = vpack.c.bf16 %v401, %v401
  %v525 = vpack.c.bf16 %v403, %v403
  %v526 = vpack.c.bf16 %v406, %v406
  %v527 = vpack.c.bf16 %v408, %v408
  %v528 = vpack.c.bf16 %v411, %v411
  %v529 = vpack.c.bf16 %v413, %v413
  %v530 = vpack.c.bf16 %v416, %v416
  %v531 = vpack.c.bf16 %v418, %v418
  %v532 = vpack.c.bf16 %v421, %v421
  %v533 = vpack.c.bf16 %v423, %v423
  %v534 = vpack.c.bf16 %v426, %v426
  %v535 = vpack.c.bf16 %v428, %v428
  %v536 = vpack.c.bf16 %v431, %v431
  %v537 = vpack.c.bf16 %v433, %v433
  %v538 = vpack.c.bf16 %v436, %v436
  %v539 = vpack.c.bf16 %v438, %v438
  %v540 = vpack.c.bf16 %v441, %v441
  %v541 = vpack.c.bf16 %v443, %v443
  %v542 = vpack.c.bf16 %v446, %v446
  %v543 = vpack.c.bf16 %v448, %v448
  %v544 = vpack.c.bf16 %v451, %v451
  %v545 = vpack.c.bf16 %v453, %v453
  %v546 = vpack.c.bf16 %v456, %v456
  %v547 = vpack.c.bf16 %v458, %v458
  %v548 = vpack.c.bf16 %v461, %v461
  %v549 = vpack.c.bf16 %v463, %v463
  %v550 = vpack.c.bf16 %v466, %v466
  %v551 = vpack.c.bf16 %v468, %v468
  %v552 = vpack.c.bf16 %v471, %v471
  %v553 = vpack.c.bf16 %v473, %v473
  %v554 = vpack.c.bf16 %v476, %v476
  %v555 = vpack.c.bf16 %v478, %v478
  %v556 = vpack.c.bf16 %v481, %v481
  %v557 = vpack.c.bf16 %v483, %v483
  %v558 = vpack.c.bf16 %v486, %v486
  %v559 = vpack.c.bf16 %v488, %v488
  %v560 = vpack.c.bf16 %v491, %v491
  %v561 = vpack.c.bf16 %v493, %v493
  %v562 = vpack.c.bf16 %v496, %v496
  %v563 = vpack.c.bf16 %v498, %v498
  %564 = vst [vmem:[%s2] sm:$0xf] %v500
  %565 = vst [vmem:[%s2 + $0x4] sm:$0xf] %v501
  %566 = vst [vmem:[%s2 + $0x8] sm:$0xf] %v502
  %567 = vst [vmem:[%s2 + $0xc] sm:$0xf] %v503
  %568 = vst [vmem:[%s2 + $0x10] sm:$0xf] %v504
  %569 = vst [vmem:[%s2 + $0x14] sm:$0xf] %v505
  %570 = vst [vmem:[%s2 + $0x18] sm:$0xf] %v506
  %571 = vst [vmem:[%s2 + $0x1c] sm:$0xf] %v507
  %572 = vst [vmem:[%s2 + $0x20] sm:$0xf] %v508
  %573 = vst [vmem:[%s2 + $0x24] sm:$0xf] %v509
  %574 = vst [vmem:[%s2 + $0x28] sm:$0xf] %v510
  %575 = vst [vmem:[%s2 + $0x2c] sm:$0xf] %v511
  %576 = vst [vmem:[%s2 + $0x30] sm:$0xf] %v512
  %577 = vst [vmem:[%s2 + $0x34] sm:$0xf] %v513
  %578 = vst [vmem:[%s2 + $0x38] sm:$0xf] %v514
  %579 = vst [vmem:[%s2 + $0x3c] sm:$0xf] %v515
  %580 = vst [vmem:[%s2 + $0x40] sm:$0xf] %v516
  %581 = vst [vmem:[%s2 + $0x44] sm:$0xf] %v517
  %582 = vst [vmem:[%s2 + $0x48] sm:$0xf] %v518
  %583 = vst [vmem:[%s2 + $0x4c] sm:$0xf] %v519
  %584 = vst [vmem:[%s2 + $0x50] sm:$0xf] %v520
  %585 = vst [vmem:[%s2 + $0x54] sm:$0xf] %v521
  %586 = vst [vmem:[%s2 + $0x58] sm:$0xf] %v522
  %587 = vst [vmem:[%s2 + $0x5c] sm:$0xf] %v523
  %588 = vst [vmem:[%s2 + $0x60] sm:$0xf] %v524
  %589 = vst [vmem:[%s2 + $0x64] sm:$0xf] %v525
  %590 = vst [vmem:[%s2 + $0x68] sm:$0xf] %v526
  %591 = vst [vmem:[%s2 + $0x6c] sm:$0xf] %v527
  %592 = vst [vmem:[%s2 + $0x70] sm:$0xf] %v528
  %593 = vst [vmem:[%s2 + $0x74] sm:$0xf] %v529
  %594 = vst [vmem:[%s2 + $0x78] sm:$0xf] %v530
  %595 = vst [vmem:[%s2 + $0x7c] sm:$0xf] %v531
  %596 = vst [vmem:[%s2 + $0x80] sm:$0xf] %v532
  %597 = vst [vmem:[%s2 + $0x84] sm:$0xf] %v533
  %598 = vst [vmem:[%s2 + $0x88] sm:$0xf] %v534
  %599 = vst [vmem:[%s2 + $0x8c] sm:$0xf] %v535
  %600 = vst [vmem:[%s2 + $0x90] sm:$0xf] %v536
  %601 = vst [vmem:[%s2 + $0x94] sm:$0xf] %v537
  %602 = vst [vmem:[%s2 + $0x98] sm:$0xf] %v538
  %603 = vst [vmem:[%s2 + $0x9c] sm:$0xf] %v539
  %604 = vst [vmem:[%s2 + $0xa0] sm:$0xf] %v540
  %605 = vst [vmem:[%s2 + $0xa4] sm:$0xf] %v541
  %606 = vst [vmem:[%s2 + $0xa8] sm:$0xf] %v542
  %607 = vst [vmem:[%s2 + $0xac] sm:$0xf] %v543
  %608 = vst [vmem:[%s2 + $0xb0] sm:$0xf] %v544
  %609 = vst [vmem:[%s2 + $0xb4] sm:$0xf] %v545
  %610 = vst [vmem:[%s2 + $0xb8] sm:$0xf] %v546
  %611 = vst [vmem:[%s2 + $0xbc] sm:$0xf] %v547
  %612 = vst [vmem:[%s2 + $0xc0] sm:$0xf] %v548
  %613 = vst [vmem:[%s2 + $0xc4] sm:$0xf] %v549
  %614 = vst [vmem:[%s2 + $0xc8] sm:$0xf] %v550
  %615 = vst [vmem:[%s2 + $0xcc] sm:$0xf] %v551
  %616 = vst [vmem:[%s2 + $0xd0] sm:$0xf] %v552
  %617 = vst [vmem:[%s2 + $0xd4] sm:$0xf] %v553
  %618 = vst [vmem:[%s2 + $0xd8] sm:$0xf] %v554
  %619 = vst [vmem:[%s2 + $0xdc] sm:$0xf] %v555
  %620 = vst [vmem:[%s2 + $0xe0] sm:$0xf] %v556
  %621 = vst [vmem:[%s2 + $0xe4] sm:$0xf] %v557
  %622 = vst [vmem:[%s2 + $0xe8] sm:$0xf] %v558
  %623 = vst [vmem:[%s2 + $0xec] sm:$0xf] %v559
  %624 = vst [vmem:[%s2 + $0xf0] sm:$0xf] %v560
  %625 = vst [vmem:[%s2 + $0xf4] sm:$0xf] %v561
  %626 = vst [vmem:[%s2 + $0xf8] sm:$0xf] %v562
  %627 = vst [vmem:[%s2 + $0xfc] sm:$0xf] %v563
  // Predicated region
  $region10: #{bayesian_conv2d_forward.3} parent=0 // pred_check
    _
  $region11: #{bayesian_conv2d_forward.3} parent=0 // pred_check_branch
    %629 = sbr.rel (0) target = $region13
  $region12: #{bayesian_conv2d_forward.3} parent=0 // pred_region
    _
  $region13: #{bayesian_conv2d_forward.3} parent=0 // pred_fallthru
    _
  // Predicated region
  $region14: #{bayesian_conv2d_forward.3} parent=0 // pred_check
    _
  $region15: #{bayesian_conv2d_forward.3} parent=0 // pred_check_branch
    %631 = sbr.rel (0) target = $region17
  $region16: #{bayesian_conv2d_forward.3} parent=0 // pred_region
    _
  $region17: #{bayesian_conv2d_forward.3} parent=0 // pred_fallthru
    _

</llo_original>
